<compile_context>
chip_gen: v7x
topology: tpu7x:2x2x1
jax: 0.10.0
libtpu: 0.0.40
codegen_flags: <defaults>
</compile_context>

<pallas_src>
import jax
import jax.numpy as jnp
from jax.experimental import pallas as pl
from jax.experimental.pallas import tpu as pltpu

H = 50  # hidden width of fc1 / fc2


def vnet_kernel(x_ref, w1_ref, b1_ref, w2_ref, b2_ref, w3_ref, b3_ref, o_ref):
    # x_ref: (1, TM) -- batch on the 128-lane axis -> lane-dense sin/cos (EUP).
    x = x_ref[...]
    sx = jnp.sin(x)                                           # (1, TM)
    cx = jnp.cos(x)                                           # (1, TM)

    # fc1 (in_features = 2): two rank-1 VPU updates instead of a K=2 matmul.
    w1 = w1_ref[...]                                          # (H, 2)
    h1 = w1[:, 0:1] * sx + w1[:, 1:2] * cx + b1_ref[...]      # (H, TM)
    h1 = jnp.cos(h1)                                          # EUP, lane-dense

    # fc2 on the MXU: (H, H) @ (H, TM), f32 accumulation, N = TM lanes.
    h2 = jnp.dot(w2_ref[...], h1, preferred_element_type=jnp.float32)
    h2 = jnp.cos(h2 + b2_ref[...])                            # (H, TM)

    # fc3 (out_features = 1): VPU multiply + XLU sublane reduce (no N=1 matmul).
    out = jnp.sum(w3_ref[...] * h2, axis=0, keepdims=True)    # (1, TM)
    o_ref[...] = out + b3_ref[0, 0]                           # lane-dense store


def v_net_forward(x, params, *, tm_max=1024):
    """x: (B, 1) float32.  params: PyTorch (out_features, in_features) layout
    weights, column-vector biases; fc3 weight stored transposed as (H, 1)."""
    B = x.shape[0]
    # Batch tile: multiple of 128 (lane width); large enough to amortize the
    # ~0.35us/step grid overhead against ~100*TM EUP ops, tiny vs VMEM.
    TM = min(tm_max, pl.cdiv(B, 128) * 128)
    B_pad = pl.cdiv(B, TM) * TM
    n_steps = B_pad // TM
    # Lane-dense transposed input slab (1, B_pad); padded lanes are sliced off.
    xT = jnp.pad(x[:, 0], (0, B_pad - B)).reshape(1, B_pad)

    # Advisory cost hint for XLA's scheduler around the custom call.
    flops = (4 * H + 2 * H * H + 2 * H) * B_pad
    transcendentals = (2 + 2 * H) * B_pad
    bytes_accessed = 4 * (2 * B_pad + (H * 2 + 3 * H + H * H + 1))

    const = lambda i: (0, 0)  # weights: same block every step -> VMEM-resident
    outT = pl.pallas_call(
        vnet_kernel,
        out_shape=jax.ShapeDtypeStruct((1, B_pad), jnp.float32),
        grid=(n_steps,),
        in_specs=[
            pl.BlockSpec((1, TM), lambda i: (0, i)),              # x tile
            pl.BlockSpec((H, 2), const),                          # w1
            pl.BlockSpec((H, 1), const),                          # b1
            pl.BlockSpec((H, H), const),                          # w2
            pl.BlockSpec((H, 1), const),                          # b2
            pl.BlockSpec((H, 1), const),                          # w3 (fc3.weight.T)
            pl.BlockSpec(memory_space=pltpu.MemorySpace.SMEM),    # b3 scalar
        ],
        out_specs=pl.BlockSpec((1, TM), lambda i: (0, i)),
        compiler_params=pltpu.CompilerParams(
            dimension_semantics=("parallel",)),                   # v7x: 2 TCs
        cost_estimate=pl.CostEstimate(
            flops=flops, transcendentals=transcendentals,
            bytes_accessed=bytes_accessed),
    )(xT, params["w1"], params["b1"], params["w2"], params["b2"],
      params["w3"], params["b3"])
    return outT[0, :B].reshape(B, 1)


def init_params(key):
    """Matches nn.init.normal_ (std-normal) on all Linear weights and biases.
    Layout: weights (out_features, in_features) as in PyTorch; biases as
    (out_features, 1) columns; fc3 weight stored transposed as (H, 1)."""
    k1, k2, k3, k4, k5, k6 = jax.random.split(key, 6)
    return {
        "w1": jax.random.normal(k1, (H, 2), jnp.float32),
        "b1": jax.random.normal(k2, (H, 1), jnp.float32),
        "w2": jax.random.normal(k3, (H, H), jnp.float32),
        "b2": jax.random.normal(k4, (H, 1), jnp.float32),
        "w3": jax.random.normal(k5, (H, 1), jnp.float32),   # fc3.weight.T
        "b3": jax.random.normal(k6, (1, 1), jnp.float32),
    }


def v_net_reference(x, p):
    """Pure-JAX reference of the PyTorch forward (for verification)."""
    feat = jnp.concatenate([jnp.sin(x), jnp.cos(x)], axis=1)      # (B, 2)
    h1 = jnp.cos(feat @ p["w1"].T + p["b1"].T)                    # (B, H)
    h2 = jnp.cos(h1 @ p["w2"].T + p["b2"].T)                      # (B, H)
    return h2 @ p["w3"] + p["b3"]                                 # (B, 1)


if __name__ == "__main__":
    key = jax.random.PRNGKey(0)
    k_param, k_x1, k_x2 = jax.random.split(key, 3)
    params = init_params(k_param)

    # Small test: B=8 (pads to a single 128-wide batch tile).
    x_small = jax.random.normal(k_x1, (8, 1), jnp.float32)
    out_small = jax.block_until_ready(v_net_forward(x_small, params))
    ref_small = v_net_reference(x_small, params)
    assert out_small.shape == (8, 1)
    assert jnp.allclose(out_small, ref_small, atol=1e-4, rtol=1e-4), (
        out_small, ref_small)

    # Multi-tile test: B=300, TM=128 -> grid of 3; exercises padding, the
    # parallel batch axis, and VMEM-resident weights across grid steps.
    x_big = jax.random.normal(k_x2, (300, 1), jnp.float32)
    out_big = jax.block_until_ready(v_net_forward(x_big, params, tm_max=128))
    ref_big = v_net_reference(x_big, params)
    assert out_big.shape == (300, 1)
    assert jnp.allclose(out_big, ref_big, atol=1e-4, rtol=1e-4), (
        out_big, ref_big)

    print("KERNEL_OK")
</pallas_src>

<mosaic_0001>
module attributes {stable_mosaic.version = 11 : i64} {
  func.func @vnet_kernel(%arg0: i32, %arg1: memref<1x128xf32, #tpu.memory_space<vmem>>, %arg2: memref<50x2xf32, #tpu.memory_space<vmem>>, %arg3: memref<50x1xf32, #tpu.memory_space<vmem>>, %arg4: memref<50x50xf32, #tpu.memory_space<vmem>>, %arg5: memref<50x1xf32, #tpu.memory_space<vmem>>, %arg6: memref<50x1xf32, #tpu.memory_space<vmem>>, %arg7: memref<1x1xf32, #tpu.memory_space<smem>>, %arg8: memref<1x128xf32, #tpu.memory_space<vmem>>) attributes {dimension_semantics = [#tpu.dimension_semantics<parallel>], iteration_bounds = array<i64: 1>, scalar_prefetch = 0 : i64, scratch_operands = 0 : i64, tpu.core_type = #tpu.core_type<tc>, window_params = [{transform_indices = @transform_0, window_bounds = array<i64: 1, 128>}, {pipeline_mode = #tpu.pipeline_mode<synchronous>, transform_indices = @transform_1, window_bounds = array<i64: 50, 2>}, {pipeline_mode = #tpu.pipeline_mode<synchronous>, transform_indices = @transform_2, window_bounds = array<i64: 50, 1>}, {pipeline_mode = #tpu.pipeline_mode<synchronous>, transform_indices = @transform_3, window_bounds = array<i64: 50, 50>}, {pipeline_mode = #tpu.pipeline_mode<synchronous>, transform_indices = @transform_4, window_bounds = array<i64: 50, 1>}, {pipeline_mode = #tpu.pipeline_mode<synchronous>, transform_indices = @transform_5, window_bounds = array<i64: 50, 1>}, {transform_indices = @transform_6, window_bounds = array<i64: 1, 1>}, {transform_indices = @transform_7, window_bounds = array<i64: 1, 128>}]} {
    %c0 = arith.constant 0 : index
    %c0_0 = arith.constant 0 : index
    %0 = vector.load %arg1[%c0, %c0_0] : memref<1x128xf32, #tpu.memory_space<vmem>>, vector<1x128xf32>
    %1 = math.sin %0 : vector<1x128xf32>
    %2 = math.cos %0 : vector<1x128xf32>
    %c0_1 = arith.constant 0 : index
    %c0_2 = arith.constant 0 : index
    %3 = vector.load %arg2[%c0_1, %c0_2] : memref<50x2xf32, #tpu.memory_space<vmem>>, vector<50x2xf32>
    %4 = vector.extract_strided_slice %3 {offsets = [0, 0], sizes = [50, 1], strides = [1, 1]} : vector<50x2xf32> to vector<50x1xf32>
    %5 = vector.broadcast %4 : vector<50x1xf32> to vector<50x128xf32>
    %6 = vector.broadcast %1 : vector<1x128xf32> to vector<50x128xf32>
    %7 = arith.mulf %5, %6 : vector<50x128xf32>
    %8 = vector.extract_strided_slice %3 {offsets = [0, 1], sizes = [50, 1], strides = [1, 1]} : vector<50x2xf32> to vector<50x1xf32>
    %9 = vector.broadcast %8 : vector<50x1xf32> to vector<50x128xf32>
    %10 = vector.broadcast %2 : vector<1x128xf32> to vector<50x128xf32>
    %11 = arith.mulf %9, %10 : vector<50x128xf32>
    %12 = arith.addf %7, %11 : vector<50x128xf32>
    %c0_3 = arith.constant 0 : index
    %c0_4 = arith.constant 0 : index
    %13 = vector.load %arg3[%c0_3, %c0_4] : memref<50x1xf32, #tpu.memory_space<vmem>>, vector<50x1xf32>
    %14 = vector.broadcast %13 : vector<50x1xf32> to vector<50x128xf32>
    %15 = arith.addf %12, %14 : vector<50x128xf32>
    %16 = math.cos %15 : vector<50x128xf32>
    %c0_5 = arith.constant 0 : index
    %c0_6 = arith.constant 0 : index
    %17 = vector.load %arg4[%c0_5, %c0_6] : memref<50x50xf32, #tpu.memory_space<vmem>>, vector<50x50xf32>
    %cst = arith.constant dense<0.000000e+00> : vector<50x128xf32>
    %18 = tpu.matmul %17, %16, %cst {dimension_numbers = #tpu.dot_dimension_numbers<[1], [0], [0], [1], [0, 0, 1, 1], [], []>} : vector<50x50xf32>, vector<50x128xf32>, vector<50x128xf32> -> vector<50x128xf32>
    %c0_7 = arith.constant 0 : index
    %c0_8 = arith.constant 0 : index
    %19 = vector.load %arg5[%c0_7, %c0_8] : memref<50x1xf32, #tpu.memory_space<vmem>>, vector<50x1xf32>
    %20 = vector.broadcast %19 : vector<50x1xf32> to vector<50x128xf32>
    %21 = arith.addf %18, %20 : vector<50x128xf32>
    %22 = math.cos %21 : vector<50x128xf32>
    %c0_9 = arith.constant 0 : index
    %c0_10 = arith.constant 0 : index
    %23 = vector.load %arg6[%c0_9, %c0_10] : memref<50x1xf32, #tpu.memory_space<vmem>>, vector<50x1xf32>
    %24 = vector.broadcast %23 : vector<50x1xf32> to vector<50x128xf32>
    %25 = arith.mulf %24, %22 : vector<50x128xf32>
    %cst_11 = arith.constant dense<0.000000e+00> : vector<128xf32>
    %26 = vector.multi_reduction <add>, %25, %cst_11 [0] : vector<50x128xf32> to vector<128xf32>
    %27 = vector.shape_cast %26 : vector<128xf32> to vector<1x128xf32>
    %c0_12 = arith.constant 0 : index
    %c0_13 = arith.constant 0 : index
    %28 = memref.load %arg7[%c0_12, %c0_13] : memref<1x1xf32, #tpu.memory_space<smem>>
    %29 = vector.broadcast %28 : f32 to vector<1x128xf32>
    %30 = arith.addf %27, %29 : vector<1x128xf32>
    %c0_14 = arith.constant 0 : index
    %c0_15 = arith.constant 0 : index
    %31 = vector.load %arg8[%c0_14, %c0_15] : memref<1x128xf32, #tpu.memory_space<vmem>>, vector<1x128xf32>
    tpu.vector_store %arg8[%c0_14, %c0_15], %30 {strides = array<i32>} : memref<1x128xf32, #tpu.memory_space<vmem>>, vector<1x128xf32>,
    return
  }
  func.func @transform_0(%arg0: i32) -> (i32, i32) {
    %c0_i32 = arith.constant 0 : i32
    %c0_i32_0 = arith.constant 0 : i32
    return %c0_i32, %arg0 : i32, i32
  }
  func.func @transform_1(%arg0: i32) -> (i32, i32) {
    %c0_i32 = arith.constant 0 : i32
    %c0_i32_0 = arith.constant 0 : i32
    %c0_i32_1 = arith.constant 0 : i32
    return %c0_i32, %c0_i32_0 : i32, i32
  }
  func.func @transform_2(%arg0: i32) -> (i32, i32) {
    %c0_i32 = arith.constant 0 : i32
    %c0_i32_0 = arith.constant 0 : i32
    %c0_i32_1 = arith.constant 0 : i32
    return %c0_i32, %c0_i32_0 : i32, i32
  }
  func.func @transform_3(%arg0: i32) -> (i32, i32) {
    %c0_i32 = arith.constant 0 : i32
    %c0_i32_0 = arith.constant 0 : i32
    %c0_i32_1 = arith.constant 0 : i32
    return %c0_i32, %c0_i32_0 : i32, i32
  }
  func.func @transform_4(%arg0: i32) -> (i32, i32) {
    %c0_i32 = arith.constant 0 : i32
    %c0_i32_0 = arith.constant 0 : i32
    %c0_i32_1 = arith.constant 0 : i32
    return %c0_i32, %c0_i32_0 : i32, i32
  }
  func.func @transform_5(%arg0: i32) -> (i32, i32) {
    %c0_i32 = arith.constant 0 : i32
    %c0_i32_0 = arith.constant 0 : i32
    %c0_i32_1 = arith.constant 0 : i32
    return %c0_i32, %c0_i32_0 : i32, i32
  }
  func.func @transform_6(%arg0: i32) -> (i32, i32) {
    %c0_i32 = arith.constant 0 : i32
    %c0_i32_0 = arith.constant 0 : i32
    %c0_i32_1 = arith.constant 0 : i32
    return %c0_i32, %c0_i32_0 : i32, i32
  }
  func.func @transform_7(%arg0: i32) -> (i32, i32) {
    %c0_i32 = arith.constant 0 : i32
    %c0_i32_0 = arith.constant 0 : i32
    return %c0_i32, %arg0 : i32, i32
  }
}

</mosaic_0001>

<llo_original>
// kernel: tpu_custom_call.1
$region0: #{tpu_custom_call.1}
  #allocation0 [shape = 'u32[]', space=smem, size = 0x4, offset = 0x4, fixed_abs, tag = 'smem constant byte address 0x4 - core index']
  #allocation1 [shape = 'u32[144,128]{1,0:T(1,128)}', space=vmem, size = 0x12000, scoped, tag = 'internal scratch']
  #allocation2 [shape = 'f32[1,1]{1,0:T(1,128)S(6)}', space=smem, size = 0x200, scoped, tag = 'scoped memory for tpu_custom_call.1']
  %s0 = inlined_call_operand.vmem [shape: f32[1,128], index: 0, kind: input, shape index: {}]
  %s1 = inlined_call_operand.vmem [shape: f32[50,2], index: 1, kind: input, shape index: {}]
  %s2 = inlined_call_operand.vmem [shape: f32[50,1], index: 2, kind: input, shape index: {}]
  %s3 = inlined_call_operand.vmem [shape: f32[50,50], index: 3, kind: input, shape index: {}]
  %s4 = inlined_call_operand.vmem [shape: f32[50,1], index: 4, kind: input, shape index: {}]
  %s5 = inlined_call_operand.vmem [shape: f32[50,1], index: 5, kind: input, shape index: {}]
  %s6 = inlined_call_operand.<no memory space> [shape: f32[1,1], index: 6, kind: input, shape index: {}]
  %s7 = inlined_call_operand.hbm [shape: f32[1,128], index: 7, kind: output, shape index: {}]
  %s8 = sld [smem:[#allocation0]]
  $region38: #{tpu_custom_call.1} parent=0
    _
  %s10 = ssub.s32 1, %s8
  %s11 = scalar_select 0, %s10, %s8
  %12 = sst [smem:[#allocation2]] %s6
  $region1: #{tpu_custom_call.1} parent=0
    #allocation3 [shape = 'u8[512]{0}', space=vmem, size = 0x400, scoped, tag = 'output window, operand 0, single buffered']
    #allocation4 [shape = 's32[1]{0}', space=sflag, size = 0x4, scoped, tag = 'scoped memory for tpu_custom_call.1']
    %13 = vsyncpa [#allocation4], 0
    // Predicated region
    $region2: #{tpu_custom_call.1} parent=1 // pred_check
      _
    $region3: #{tpu_custom_call.1} parent=1 // pred_check_branch
      %15 = sbr.rel (0) target = $region5
    $region4: #{tpu_custom_call.1} parent=1 // pred_region
      _
    $region5: #{tpu_custom_call.1} parent=1 // pred_fallthru
      _
    // Predicated region
    $region6: #{tpu_custom_call.1} parent=1 // pred_check
      _
    $region7: #{tpu_custom_call.1} parent=1 // pred_check_branch
      %17 = sbr.rel (0) target = $region9
    $region8: #{tpu_custom_call.1} parent=1 // pred_region
      _
    $region9: #{tpu_custom_call.1} parent=1 // pred_fallthru
      _
    // Predicated region
    $region10: #{tpu_custom_call.1} parent=1 // pred_check
      _
    $region11: #{tpu_custom_call.1} parent=1 // pred_check_branch
      %19 = sbr.rel (0) target = $region13
    $region12: #{tpu_custom_call.1} parent=1 // pred_region
      _
    $region13: #{tpu_custom_call.1} parent=1 // pred_fallthru
      _
    // Predicated region
    $region14: #{tpu_custom_call.1} parent=1 // pred_check
      _
    $region15: #{tpu_custom_call.1} parent=1 // pred_check_branch
      %21 = sbr.rel (0) target = $region17
    $region16: #{tpu_custom_call.1} parent=1 // pred_region
      _
    $region17: #{tpu_custom_call.1} parent=1 // pred_fallthru
      _
    // Predicated region
    $region18: #{tpu_custom_call.1} parent=1 // pred_check
      _
    $region19: #{tpu_custom_call.1} parent=1 // pred_check_branch
      %23 = sbr.rel (0) target = $region21
    $region20: #{tpu_custom_call.1} parent=1 // pred_region
      _
    $region21: #{tpu_custom_call.1} parent=1 // pred_fallthru
      _
    // Predicated region
    $region22: #{tpu_custom_call.1} parent=1 // pred_check
      _
    $region23: #{tpu_custom_call.1} parent=1 // pred_check_branch
      %25 = sbr.rel (0) target = $region25
    $region24: #{tpu_custom_call.1} parent=1 // pred_region
      _
    $region25: #{tpu_custom_call.1} parent=1 // pred_fallthru
      _
    // Predicated region
    $region26: #{tpu_custom_call.1} parent=1 // pred_check
      _
    $region27: #{tpu_custom_call.1} parent=1 // pred_check_branch
      %27 = sbr.rel (0) target = $region29
    $region28: #{tpu_custom_call.1} parent=1 // pred_region
      _
    $region29: #{tpu_custom_call.1} parent=1 // pred_fallthru
      _
    %v28 = vld [vmem:[%s0] sm:$0x1]
    %v29 = vand.u32 2147483647, %v28
    %vm30 = vcmp.le.f32.partialorder %v29, 0.7853982
    %vm31 = vcmp.lt.s32.totalorder %v28, 0
    %v32 = vand.u32 %v28, 2139095040
    %v33 = vshrl.u32 %v32, 23
    %v34 = vsub.s32 %v33, 127
    %v35 = vand.u32 2147483647, %v28
    %v36 = vand.u32 %v35, 8388607
    %v37 = vor.u32 %v36, 8388608
    %v38 = vsub.s32 0, %v37
    %v39 = vadd.s32 %v34, 1
    %vm40 = vcmp.gt.s32.totalorder %v39, 0
    %v41 = vsel %vm40, %v39, 0
    %v42 = vshrl.u32 %v41, 5
    %v43 = vand.u32 %v41, 31
    %v44 = vsub.s32 32, %v43
    %v45 = vshrl.u32 683565275, %v44
    %v46 = vshll.u32 683565275, %v43
    %v47 = vshrl.u32 2475754826, %v44
    %v48 = vor.u32 %v46, %v47
    %v49 = vshll.u32 2475754826, %v43
    %v50 = vshrl.u32 2131351028, %v44
    %v51 = vor.u32 %v49, %v50
    %v52 = vshll.u32 2131351028, %v43
    %v53 = vshrl.u32 2102212464, %v44
    %v54 = vor.u32 %v52, %v53
    %v55 = vshll.u32 2102212464, %v43
    %v56 = vshrl.u32 920167782, %v44
    %v57 = vor.u32 %v55, %v56
    %v58 = vshll.u32 920167782, %v43
    %v59 = vshrl.u32 1326507024, %v44
    %v60 = vor.u32 %v58, %v59
    %vm61 = vcmp.lt.s32.totalorder %v42, 1
    %vm62 = vcmp.lt.s32.totalorder %v42, 2
    %vm63 = vcmp.lt.s32.totalorder %v42, 3
    %vm64 = vcmp.lt.s32.totalorder %v42, 4
    %v65 = vsel %vm61, %v45, %v48
    %v66 = vsel %vm64, %v54, 2102212464
    %v67 = vsel %vm63, %v51, %v66
    %v68 = vsel %vm62, %v65, %v67
    %v69 = vsel %vm61, %v48, %v51
    %v70 = vsel %vm64, %v57, 920167782
    %v71 = vsel %vm63, %v54, %v70
    %v72 = vsel %vm62, %v69, %v71
    %v73 = vsel %vm61, %v51, %v54
    %v74 = vsel %vm64, %v60, 1326507024
    %v75 = vsel %vm63, %v57, %v74
    %v76 = vsel %vm62, %v73, %v75
    %v77 = vshll.u32 %v37, 8
    %v78 = vmul.u32.u64.compose %v77, %v76
    %v79 = vextract.low.u32 %v78
    %v80 = vextract.high.u32 %v78
    %v81 = vmul.u32.u64.compose %v77, %v72
    %v82 = vextract.low.u32 %v81
    %v83 = vextract.high.u32 %v81
    %v84 = vmul.u32 %v77, %v68
    %v85 = vadd.s32 %v80, %v82
    %vm86 = vc.u32 %v80, %v82
    %v87 = vadd.s32 %v83, 1
    %v88 = vsel %vm86, %v87, %v83
    %v89 = vadd.s32 %v84, %v88
    %v90 = vadd.s32 %v89, 536870912
    %v91 = vshrl.u32 %v90, 30
    %v92 = vshll.u32 %v91, 30
    %v93 = vsub.s32 %v89, %v92
    %vm94 = vcmp.lt.s32.totalorder %v93, 0
    %v95 = vsub.s32 0, %v93
    %v96 = vsel %vm94, %v95, %v93
    %v97 = vclz %v96
    %v98 = vsub.s32 %v97, 2
    %vm99 = vcmp.gt.s32.totalorder 0, %v98
    %v100 = vsel %vm99, 0, %v98
    %v101 = vsub.s32 32, %v100
    %v102 = vshll.u32 %v93, %v100
    %v103 = vshrl.u32 %v85, %v101
    %v104 = vor.u32 %v102, %v103
    %v105 = vsub.s32 4294967266, %v100
    %v106 = vadd.s32 %v105, 127
    %v107 = vshll.u32 %v106, 23
    %v108 = vor.u32 4788187, %v107
    %v109 = vand.u32 2147483647, %v108
    %v111 = vcvt.s32.f32 %v104
    %v112 = vmul.f32 %v111, %v109
    %v113 = vxor.u32 %v112, 2147483648
    %v114 = vsel %vm31, %v113, %v112
    %v115 = vsub.s32 4, %v91
    %v116 = vsel %vm31, %v115, %v91
    %v117 = vsel %vm30, %v28, %v114
    %v118 = vsel %vm30, 0, %v116
    %v119 = vcosq.f32.pop %v117
    %v120 = vsinq.f32.pop %v117
    %vm121 = vweird.f32 %v28
    %v122 = vadd.s32 %v118, 3
    %v123 = vand.u32 %v122, 3
    %vm124 = vcmp.lt.s32.totalorder %v123, 2
    %vm125 = vcmp.eq.s32.totalorder %v123, 0
    %v126 = vxor.u32 %v120, 2147483648
    %v127 = vsel %vm125, %v119, %v126
    %vm128 = vcmp.eq.s32.totalorder %v123, 2
    %v129 = vxor.u32 %v119, 2147483648
    %v130 = vsel %vm128, %v129, %v120
    %v131 = vsel %vm124, %v127, %v130
    %v132 = vsel %vm121, nan, %v131
    %v133 = vand.u32 2147483647, %v28
    %vm134 = vcmp.le.f32.partialorder %v133, 0.7853982
    %vm135 = vcmp.lt.s32.totalorder %v28, 0
    %v136 = vand.u32 %v28, 2139095040
    %v137 = vshrl.u32 %v136, 23
    %v138 = vsub.s32 %v137, 127
    %v139 = vand.u32 2147483647, %v28
    %v140 = vand.u32 %v139, 8388607
    %v141 = vor.u32 %v140, 8388608
    %v142 = vsub.s32 0, %v141
    %v143 = vadd.s32 %v138, 1
    %vm144 = vcmp.gt.s32.totalorder %v143, 0
    %v145 = vsel %vm144, %v143, 0
    %v146 = vshrl.u32 %v145, 5
    %v147 = vand.u32 %v145, 31
    %v148 = vsub.s32 32, %v147
    %v149 = vshrl.u32 683565275, %v148
    %v150 = vshll.u32 683565275, %v147
    %v151 = vshrl.u32 2475754826, %v148
    %v152 = vor.u32 %v150, %v151
    %v153 = vshll.u32 2475754826, %v147
    %v154 = vshrl.u32 2131351028, %v148
    %v155 = vor.u32 %v153, %v154
    %v156 = vshll.u32 2131351028, %v147
    %v157 = vshrl.u32 2102212464, %v148
    %v158 = vor.u32 %v156, %v157
    %v159 = vshll.u32 2102212464, %v147
    %v160 = vshrl.u32 920167782, %v148
    %v161 = vor.u32 %v159, %v160
    %v162 = vshll.u32 920167782, %v147
    %v163 = vshrl.u32 1326507024, %v148
    %v164 = vor.u32 %v162, %v163
    %vm165 = vcmp.lt.s32.totalorder %v146, 1
    %vm166 = vcmp.lt.s32.totalorder %v146, 2
    %vm167 = vcmp.lt.s32.totalorder %v146, 3
    %vm168 = vcmp.lt.s32.totalorder %v146, 4
    %v169 = vsel %vm165, %v149, %v152
    %v170 = vsel %vm168, %v158, 2102212464
    %v171 = vsel %vm167, %v155, %v170
    %v172 = vsel %vm166, %v169, %v171
    %v173 = vsel %vm165, %v152, %v155
    %v174 = vsel %vm168, %v161, 920167782
    %v175 = vsel %vm167, %v158, %v174
    %v176 = vsel %vm166, %v173, %v175
    %v177 = vsel %vm165, %v155, %v158
    %v178 = vsel %vm168, %v164, 1326507024
    %v179 = vsel %vm167, %v161, %v178
    %v180 = vsel %vm166, %v177, %v179
    %v181 = vshll.u32 %v141, 8
    %v182 = vmul.u32.u64.compose %v181, %v180
    %v183 = vextract.low.u32 %v182
    %v184 = vextract.high.u32 %v182
    %v185 = vmul.u32.u64.compose %v181, %v176
    %v186 = vextract.low.u32 %v185
    %v187 = vextract.high.u32 %v185
    %v188 = vmul.u32 %v181, %v172
    %v189 = vadd.s32 %v184, %v186
    %vm190 = vc.u32 %v184, %v186
    %v191 = vadd.s32 %v187, 1
    %v192 = vsel %vm190, %v191, %v187
    %v193 = vadd.s32 %v188, %v192
    %v194 = vadd.s32 %v193, 536870912
    %v195 = vshrl.u32 %v194, 30
    %v196 = vshll.u32 %v195, 30
    %v197 = vsub.s32 %v193, %v196
    %vm198 = vcmp.lt.s32.totalorder %v197, 0
    %v199 = vsub.s32 0, %v197
    %v200 = vsel %vm198, %v199, %v197
    %v201 = vclz %v200
    %v202 = vsub.s32 %v201, 2
    %vm203 = vcmp.gt.s32.totalorder 0, %v202
    %v204 = vsel %vm203, 0, %v202
    %v205 = vsub.s32 32, %v204
    %v206 = vshll.u32 %v197, %v204
    %v207 = vshrl.u32 %v189, %v205
    %v208 = vor.u32 %v206, %v207
    %v209 = vsub.s32 4294967266, %v204
    %v210 = vadd.s32 %v209, 127
    %v211 = vshll.u32 %v210, 23
    %v212 = vor.u32 4788187, %v211
    %v213 = vand.u32 2147483647, %v212
    %v215 = vcvt.s32.f32 %v208
    %v216 = vmul.f32 %v215, %v213
    %v217 = vxor.u32 %v216, 2147483648
    %v218 = vsel %vm135, %v217, %v216
    %v219 = vsub.s32 4, %v195
    %v220 = vsel %vm135, %v219, %v195
    %v221 = vsel %vm134, %v28, %v218
    %v222 = vsel %vm134, 0, %v220
    %v223 = vcosq.f32.pop %v221
    %v224 = vsinq.f32.pop %v221
    %vm225 = vweird.f32 %v28
    %v226 = vand.u32 %v222, 3
    %vm227 = vcmp.lt.s32.totalorder %v226, 2
    %vm228 = vcmp.eq.s32.totalorder %v226, 0
    %v229 = vxor.u32 %v224, 2147483648
    %v230 = vsel %vm228, %v223, %v229
    %vm231 = vcmp.eq.s32.totalorder %v226, 2
    %v232 = vxor.u32 %v223, 2147483648
    %v233 = vsel %vm231, %v232, %v224
    %v234 = vsel %vm227, %v230, %v233
    %v235 = vsel %vm225, nan, %v234
    %v236 = vld [vmem:[%s1] sm:$0xff]
    %v237 = vld [vmem:[%s1 + $0x8] sm:$0xff]
    %v238 = vld [vmem:[%s1 + $0x10] sm:$0xff]
    %v239 = vld [vmem:[%s1 + $0x18] sm:$0xff]
    %v240 = vld [vmem:[%s1 + $0x20] sm:$0xff]
    %v241 = vld [vmem:[%s1 + $0x28] sm:$0xff]
    %v242 = vld [vmem:[%s1 + $0x30] sm:$0x3]
    %244 = vset.pattern.permute.xlu0 0
    %245 = vperm.xlu0 %244, %v236
    %v246 = vpop.permute.xlu0 %245
    %249 = vset.pattern.permute.xlu0 0
    %250 = vperm.xlu0 %249, %v237
    %v251 = vpop.permute.xlu0 %250
    %254 = vset.pattern.permute.xlu0 0
    %255 = vperm.xlu0 %254, %v238
    %v256 = vpop.permute.xlu0 %255
    %259 = vset.pattern.permute.xlu0 0
    %260 = vperm.xlu0 %259, %v239
    %v261 = vpop.permute.xlu0 %260
    %264 = vset.pattern.permute.xlu0 0
    %265 = vperm.xlu0 %264, %v240
    %v266 = vpop.permute.xlu0 %265
    %269 = vset.pattern.permute.xlu0 0
    %270 = vperm.xlu0 %269, %v241
    %v271 = vpop.permute.xlu0 %270
    %274 = vset.pattern.permute.xlu0 0
    %275 = vperm.xlu0 %274, %v242
    %v276 = vpop.permute.xlu0 %275
    %v279 = vlaneseq
    %v280 = vshrl.u32 %v279, 7
    %v281 = vsub.s32 0, %v280
    %v282 = vrot.slane %v132, %v281
    %v284 = vmul.f32 %v246, %v282
    %v285 = vmul.f32 %v251, %v282
    %v286 = vmul.f32 %v256, %v282
    %v287 = vmul.f32 %v261, %v282
    %v288 = vmul.f32 %v266, %v282
    %v289 = vmul.f32 %v271, %v282
    %v290 = vmul.f32 %v276, %v282
    %291 = vset.pattern.permute.xlu0 1
    %292 = vperm.xlu0 %291, %v236
    %v293 = vpop.permute.xlu0 %292
    %295 = vset.pattern.permute.xlu0 1
    %296 = vperm.xlu0 %295, %v237
    %v297 = vpop.permute.xlu0 %296
    %299 = vset.pattern.permute.xlu0 1
    %300 = vperm.xlu0 %299, %v238
    %v301 = vpop.permute.xlu0 %300
    %303 = vset.pattern.permute.xlu0 1
    %304 = vperm.xlu0 %303, %v239
    %v305 = vpop.permute.xlu0 %304
    %307 = vset.pattern.permute.xlu0 1
    %308 = vperm.xlu0 %307, %v240
    %v309 = vpop.permute.xlu0 %308
    %311 = vset.pattern.permute.xlu0 1
    %312 = vperm.xlu0 %311, %v241
    %v313 = vpop.permute.xlu0 %312
    %315 = vset.pattern.permute.xlu0 1
    %316 = vperm.xlu0 %315, %v242
    %v317 = vpop.permute.xlu0 %316
    %v320 = vlaneseq
    %v321 = vshrl.u32 %v320, 7
    %v322 = vsub.s32 0, %v321
    %v323 = vrot.slane %v235, %v322
    %v325 = vmul.f32 %v293, %v323
    %v326 = vmul.f32 %v297, %v323
    %v327 = vmul.f32 %v301, %v323
    %v328 = vmul.f32 %v305, %v323
    %v329 = vmul.f32 %v309, %v323
    %v330 = vmul.f32 %v313, %v323
    %v331 = vmul.f32 %v317, %v323
    %v332 = vadd.f32 %v284, %v325
    %v333 = vadd.f32 %v285, %v326
    %v334 = vadd.f32 %v286, %v327
    %v335 = vadd.f32 %v287, %v328
    %v336 = vadd.f32 %v288, %v329
    %v337 = vadd.f32 %v289, %v330
    %v338 = vadd.f32 %v290, %v331
    %v339 = vld [vmem:[%s2] sm:$0xff]
    %v340 = vld [vmem:[%s2 + $0x8] sm:$0xff]
    %v341 = vld [vmem:[%s2 + $0x10] sm:$0xff]
    %v342 = vld [vmem:[%s2 + $0x18] sm:$0xff]
    %v343 = vld [vmem:[%s2 + $0x20] sm:$0xff]
    %v344 = vld [vmem:[%s2 + $0x28] sm:$0xff]
    %v345 = vld [vmem:[%s2 + $0x30] sm:$0x3]
    %347 = vset.pattern.permute.xlu0 0
    %348 = vperm.xlu0 %347, %v339
    %v349 = vpop.permute.xlu0 %348
    %352 = vset.pattern.permute.xlu0 0
    %353 = vperm.xlu0 %352, %v340
    %v354 = vpop.permute.xlu0 %353
    %357 = vset.pattern.permute.xlu0 0
    %358 = vperm.xlu0 %357, %v341
    %v359 = vpop.permute.xlu0 %358
    %362 = vset.pattern.permute.xlu0 0
    %363 = vperm.xlu0 %362, %v342
    %v364 = vpop.permute.xlu0 %363
    %367 = vset.pattern.permute.xlu0 0
    %368 = vperm.xlu0 %367, %v343
    %v369 = vpop.permute.xlu0 %368
    %372 = vset.pattern.permute.xlu0 0
    %373 = vperm.xlu0 %372, %v344
    %v374 = vpop.permute.xlu0 %373
    %377 = vset.pattern.permute.xlu0 0
    %378 = vperm.xlu0 %377, %v345
    %v379 = vpop.permute.xlu0 %378
    %v381 = vadd.f32 %v332, %v349
    %v382 = vadd.f32 %v333, %v354
    %v383 = vadd.f32 %v334, %v359
    %v384 = vadd.f32 %v335, %v364
    %v385 = vadd.f32 %v336, %v369
    %v386 = vadd.f32 %v337, %v374
    %v387 = vadd.f32 %v338, %v379
    %v388 = vand.u32 2147483647, %v381
    %vm389 = vcmp.le.f32.partialorder %v388, 0.7853982
    %vm390 = vcmp.lt.s32.totalorder %v381, 0
    %v391 = vand.u32 %v381, 2139095040
    %v392 = vshrl.u32 %v391, 23
    %v393 = vsub.s32 %v392, 127
    %v394 = vand.u32 2147483647, %v381
    %v395 = vand.u32 %v394, 8388607
    %v396 = vor.u32 %v395, 8388608
    %v397 = vsub.s32 0, %v396
    %v398 = vadd.s32 %v393, 1
    %vm399 = vcmp.gt.s32.totalorder %v398, 0
    %v400 = vsel %vm399, %v398, 0
    %v401 = vshrl.u32 %v400, 5
    %v402 = vand.u32 %v400, 31
    %v403 = vsub.s32 32, %v402
    %v404 = vshrl.u32 683565275, %v403
    %v405 = vshll.u32 683565275, %v402
    %v406 = vshrl.u32 2475754826, %v403
    %v407 = vor.u32 %v405, %v406
    %v408 = vshll.u32 2475754826, %v402
    %v409 = vshrl.u32 2131351028, %v403
    %v410 = vor.u32 %v408, %v409
    %v411 = vshll.u32 2131351028, %v402
    %v412 = vshrl.u32 2102212464, %v403
    %v413 = vor.u32 %v411, %v412
    %v414 = vshll.u32 2102212464, %v402
    %v415 = vshrl.u32 920167782, %v403
    %v416 = vor.u32 %v414, %v415
    %v417 = vshll.u32 920167782, %v402
    %v418 = vshrl.u32 1326507024, %v403
    %v419 = vor.u32 %v417, %v418
    %vm420 = vcmp.lt.s32.totalorder %v401, 1
    %vm421 = vcmp.lt.s32.totalorder %v401, 2
    %vm422 = vcmp.lt.s32.totalorder %v401, 3
    %vm423 = vcmp.lt.s32.totalorder %v401, 4
    %v424 = vsel %vm420, %v404, %v407
    %v425 = vsel %vm423, %v413, 2102212464
    %v426 = vsel %vm422, %v410, %v425
    %v427 = vsel %vm421, %v424, %v426
    %v428 = vsel %vm420, %v407, %v410
    %v429 = vsel %vm423, %v416, 920167782
    %v430 = vsel %vm422, %v413, %v429
    %v431 = vsel %vm421, %v428, %v430
    %v432 = vsel %vm420, %v410, %v413
    %v433 = vsel %vm423, %v419, 1326507024
    %v434 = vsel %vm422, %v416, %v433
    %v435 = vsel %vm421, %v432, %v434
    %v436 = vshll.u32 %v396, 8
    %v437 = vmul.u32.u64.compose %v436, %v435
    %v438 = vextract.low.u32 %v437
    %v439 = vextract.high.u32 %v437
    %v440 = vmul.u32.u64.compose %v436, %v431
    %v441 = vextract.low.u32 %v440
    %v442 = vextract.high.u32 %v440
    %v443 = vmul.u32 %v436, %v427
    %v444 = vadd.s32 %v439, %v441
    %vm445 = vc.u32 %v439, %v441
    %v446 = vadd.s32 %v442, 1
    %v447 = vsel %vm445, %v446, %v442
    %v448 = vadd.s32 %v443, %v447
    %v449 = vadd.s32 %v448, 536870912
    %v450 = vshrl.u32 %v449, 30
    %v451 = vshll.u32 %v450, 30
    %v452 = vsub.s32 %v448, %v451
    %vm453 = vcmp.lt.s32.totalorder %v452, 0
    %v454 = vsub.s32 0, %v452
    %v455 = vsel %vm453, %v454, %v452
    %v456 = vclz %v455
    %v457 = vsub.s32 %v456, 2
    %vm458 = vcmp.gt.s32.totalorder 0, %v457
    %v459 = vsel %vm458, 0, %v457
    %v460 = vsub.s32 32, %v459
    %v461 = vshll.u32 %v452, %v459
    %v462 = vshrl.u32 %v444, %v460
    %v463 = vor.u32 %v461, %v462
    %v464 = vsub.s32 4294967266, %v459
    %v465 = vadd.s32 %v464, 127
    %v466 = vshll.u32 %v465, 23
    %v467 = vor.u32 4788187, %v466
    %v468 = vand.u32 2147483647, %v467
    %v470 = vcvt.s32.f32 %v463
    %v471 = vmul.f32 %v470, %v468
    %v472 = vxor.u32 %v471, 2147483648
    %v473 = vsel %vm390, %v472, %v471
    %v474 = vsub.s32 4, %v450
    %v475 = vsel %vm390, %v474, %v450
    %v476 = vsel %vm389, %v381, %v473
    %v477 = vsel %vm389, 0, %v475
    %v478 = vcosq.f32.pop %v476
    %v479 = vsinq.f32.pop %v476
    %vm480 = vweird.f32 %v381
    %v481 = vand.u32 %v477, 3
    %vm482 = vcmp.lt.s32.totalorder %v481, 2
    %vm483 = vcmp.eq.s32.totalorder %v481, 0
    %v484 = vxor.u32 %v479, 2147483648
    %v485 = vsel %vm483, %v478, %v484
    %vm486 = vcmp.eq.s32.totalorder %v481, 2
    %v487 = vxor.u32 %v478, 2147483648
    %v488 = vsel %vm486, %v487, %v479
    %v489 = vsel %vm482, %v485, %v488
    %v490 = vsel %vm480, nan, %v489
    %v491 = vand.u32 2147483647, %v382
    %vm492 = vcmp.le.f32.partialorder %v491, 0.7853982
    %vm493 = vcmp.lt.s32.totalorder %v382, 0
    %v494 = vand.u32 %v382, 2139095040
    %v495 = vshrl.u32 %v494, 23
    %v496 = vsub.s32 %v495, 127
    %v497 = vand.u32 2147483647, %v382
    %v498 = vand.u32 %v497, 8388607
    %v499 = vor.u32 %v498, 8388608
    %v500 = vsub.s32 0, %v499
    %v501 = vadd.s32 %v496, 1
    %vm502 = vcmp.gt.s32.totalorder %v501, 0
    %v503 = vsel %vm502, %v501, 0
    %v504 = vshrl.u32 %v503, 5
    %v505 = vand.u32 %v503, 31
    %v506 = vsub.s32 32, %v505
    %v507 = vshrl.u32 683565275, %v506
    %v508 = vshll.u32 683565275, %v505
    %v509 = vshrl.u32 2475754826, %v506
    %v510 = vor.u32 %v508, %v509
    %v511 = vshll.u32 2475754826, %v505
    %v512 = vshrl.u32 2131351028, %v506
    %v513 = vor.u32 %v511, %v512
    %v514 = vshll.u32 2131351028, %v505
    %v515 = vshrl.u32 2102212464, %v506
    %v516 = vor.u32 %v514, %v515
    %v517 = vshll.u32 2102212464, %v505
    %v518 = vshrl.u32 920167782, %v506
    %v519 = vor.u32 %v517, %v518
    %v520 = vshll.u32 920167782, %v505
    %v521 = vshrl.u32 1326507024, %v506
    %v522 = vor.u32 %v520, %v521
    %vm523 = vcmp.lt.s32.totalorder %v504, 1
    %vm524 = vcmp.lt.s32.totalorder %v504, 2
    %vm525 = vcmp.lt.s32.totalorder %v504, 3
    %vm526 = vcmp.lt.s32.totalorder %v504, 4
    %v527 = vsel %vm523, %v507, %v510
    %v528 = vsel %vm526, %v516, 2102212464
    %v529 = vsel %vm525, %v513, %v528
    %v530 = vsel %vm524, %v527, %v529
    %v531 = vsel %vm523, %v510, %v513
    %v532 = vsel %vm526, %v519, 920167782
    %v533 = vsel %vm525, %v516, %v532
    %v534 = vsel %vm524, %v531, %v533
    %v535 = vsel %vm523, %v513, %v516
    %v536 = vsel %vm526, %v522, 1326507024
    %v537 = vsel %vm525, %v519, %v536
    %v538 = vsel %vm524, %v535, %v537
    %v539 = vshll.u32 %v499, 8
    %v540 = vmul.u32.u64.compose %v539, %v538
    %v541 = vextract.low.u32 %v540
    %v542 = vextract.high.u32 %v540
    %v543 = vmul.u32.u64.compose %v539, %v534
    %v544 = vextract.low.u32 %v543
    %v545 = vextract.high.u32 %v543
    %v546 = vmul.u32 %v539, %v530
    %v547 = vadd.s32 %v542, %v544
    %vm548 = vc.u32 %v542, %v544
    %v549 = vadd.s32 %v545, 1
    %v550 = vsel %vm548, %v549, %v545
    %v551 = vadd.s32 %v546, %v550
    %v552 = vadd.s32 %v551, 536870912
    %v553 = vshrl.u32 %v552, 30
    %v554 = vshll.u32 %v553, 30
    %v555 = vsub.s32 %v551, %v554
    %vm556 = vcmp.lt.s32.totalorder %v555, 0
    %v557 = vsub.s32 0, %v555
    %v558 = vsel %vm556, %v557, %v555
    %v559 = vclz %v558
    %v560 = vsub.s32 %v559, 2
    %vm561 = vcmp.gt.s32.totalorder 0, %v560
    %v562 = vsel %vm561, 0, %v560
    %v563 = vsub.s32 32, %v562
    %v564 = vshll.u32 %v555, %v562
    %v565 = vshrl.u32 %v547, %v563
    %v566 = vor.u32 %v564, %v565
    %v567 = vsub.s32 4294967266, %v562
    %v568 = vadd.s32 %v567, 127
    %v569 = vshll.u32 %v568, 23
    %v570 = vor.u32 4788187, %v569
    %v571 = vand.u32 2147483647, %v570
    %v573 = vcvt.s32.f32 %v566
    %v574 = vmul.f32 %v573, %v571
    %v575 = vxor.u32 %v574, 2147483648
    %v576 = vsel %vm493, %v575, %v574
    %v577 = vsub.s32 4, %v553
    %v578 = vsel %vm493, %v577, %v553
    %v579 = vsel %vm492, %v382, %v576
    %v580 = vsel %vm492, 0, %v578
    %v581 = vcosq.f32.pop %v579
    %v582 = vsinq.f32.pop %v579
    %vm583 = vweird.f32 %v382
    %v584 = vand.u32 %v580, 3
    %vm585 = vcmp.lt.s32.totalorder %v584, 2
    %vm586 = vcmp.eq.s32.totalorder %v584, 0
    %v587 = vxor.u32 %v582, 2147483648
    %v588 = vsel %vm586, %v581, %v587
    %vm589 = vcmp.eq.s32.totalorder %v584, 2
    %v590 = vxor.u32 %v581, 2147483648
    %v591 = vsel %vm589, %v590, %v582
    %v592 = vsel %vm585, %v588, %v591
    %v593 = vsel %vm583, nan, %v592
    %v594 = vand.u32 2147483647, %v383
    %vm595 = vcmp.le.f32.partialorder %v594, 0.7853982
    %vm596 = vcmp.lt.s32.totalorder %v383, 0
    %v597 = vand.u32 %v383, 2139095040
    %v598 = vshrl.u32 %v597, 23
    %v599 = vsub.s32 %v598, 127
    %v600 = vand.u32 2147483647, %v383
    %v601 = vand.u32 %v600, 8388607
    %v602 = vor.u32 %v601, 8388608
    %v603 = vsub.s32 0, %v602
    %v604 = vadd.s32 %v599, 1
    %vm605 = vcmp.gt.s32.totalorder %v604, 0
    %v606 = vsel %vm605, %v604, 0
    %v607 = vshrl.u32 %v606, 5
    %v608 = vand.u32 %v606, 31
    %v609 = vsub.s32 32, %v608
    %v610 = vshrl.u32 683565275, %v609
    %v611 = vshll.u32 683565275, %v608
    %v612 = vshrl.u32 2475754826, %v609
    %v613 = vor.u32 %v611, %v612
    %v614 = vshll.u32 2475754826, %v608
    %v615 = vshrl.u32 2131351028, %v609
    %v616 = vor.u32 %v614, %v615
    %v617 = vshll.u32 2131351028, %v608
    %v618 = vshrl.u32 2102212464, %v609
    %v619 = vor.u32 %v617, %v618
    %v620 = vshll.u32 2102212464, %v608
    %v621 = vshrl.u32 920167782, %v609
    %v622 = vor.u32 %v620, %v621
    %v623 = vshll.u32 920167782, %v608
    %v624 = vshrl.u32 1326507024, %v609
    %v625 = vor.u32 %v623, %v624
    %vm626 = vcmp.lt.s32.totalorder %v607, 1
    %vm627 = vcmp.lt.s32.totalorder %v607, 2
    %vm628 = vcmp.lt.s32.totalorder %v607, 3
    %vm629 = vcmp.lt.s32.totalorder %v607, 4
    %v630 = vsel %vm626, %v610, %v613
    %v631 = vsel %vm629, %v619, 2102212464
    %v632 = vsel %vm628, %v616, %v631
    %v633 = vsel %vm627, %v630, %v632
    %v634 = vsel %vm626, %v613, %v616
    %v635 = vsel %vm629, %v622, 920167782
    %v636 = vsel %vm628, %v619, %v635
    %v637 = vsel %vm627, %v634, %v636
    %v638 = vsel %vm626, %v616, %v619
    %v639 = vsel %vm629, %v625, 1326507024
    %v640 = vsel %vm628, %v622, %v639
    %v641 = vsel %vm627, %v638, %v640
    %v642 = vshll.u32 %v602, 8
    %v643 = vmul.u32.u64.compose %v642, %v641
    %v644 = vextract.low.u32 %v643
    %v645 = vextract.high.u32 %v643
    %v646 = vmul.u32.u64.compose %v642, %v637
    %v647 = vextract.low.u32 %v646
    %v648 = vextract.high.u32 %v646
    %v649 = vmul.u32 %v642, %v633
    %v650 = vadd.s32 %v645, %v647
    %vm651 = vc.u32 %v645, %v647
    %v652 = vadd.s32 %v648, 1
    %v653 = vsel %vm651, %v652, %v648
    %v654 = vadd.s32 %v649, %v653
    %v655 = vadd.s32 %v654, 536870912
    %v656 = vshrl.u32 %v655, 30
    %v657 = vshll.u32 %v656, 30
    %v658 = vsub.s32 %v654, %v657
    %vm659 = vcmp.lt.s32.totalorder %v658, 0
    %v660 = vsub.s32 0, %v658
    %v661 = vsel %vm659, %v660, %v658
    %v662 = vclz %v661
    %v663 = vsub.s32 %v662, 2
    %vm664 = vcmp.gt.s32.totalorder 0, %v663
    %v665 = vsel %vm664, 0, %v663
    %v666 = vsub.s32 32, %v665
    %v667 = vshll.u32 %v658, %v665
    %v668 = vshrl.u32 %v650, %v666
    %v669 = vor.u32 %v667, %v668
    %v670 = vsub.s32 4294967266, %v665
    %v671 = vadd.s32 %v670, 127
    %v672 = vshll.u32 %v671, 23
    %v673 = vor.u32 4788187, %v672
    %v674 = vand.u32 2147483647, %v673
    %v676 = vcvt.s32.f32 %v669
    %v677 = vmul.f32 %v676, %v674
    %v678 = vxor.u32 %v677, 2147483648
    %v679 = vsel %vm596, %v678, %v677
    %v680 = vsub.s32 4, %v656
    %v681 = vsel %vm596, %v680, %v656
    %v682 = vsel %vm595, %v383, %v679
    %v683 = vsel %vm595, 0, %v681
    %v684 = vcosq.f32.pop %v682
    %v685 = vsinq.f32.pop %v682
    %vm686 = vweird.f32 %v383
    %v687 = vand.u32 %v683, 3
    %vm688 = vcmp.lt.s32.totalorder %v687, 2
    %vm689 = vcmp.eq.s32.totalorder %v687, 0
    %v690 = vxor.u32 %v685, 2147483648
    %v691 = vsel %vm689, %v684, %v690
    %vm692 = vcmp.eq.s32.totalorder %v687, 2
    %v693 = vxor.u32 %v684, 2147483648
    %v694 = vsel %vm692, %v693, %v685
    %v695 = vsel %vm688, %v691, %v694
    %v696 = vsel %vm686, nan, %v695
    %v697 = vand.u32 2147483647, %v384
    %vm698 = vcmp.le.f32.partialorder %v697, 0.7853982
    %vm699 = vcmp.lt.s32.totalorder %v384, 0
    %v700 = vand.u32 %v384, 2139095040
    %v701 = vshrl.u32 %v700, 23
    %v702 = vsub.s32 %v701, 127
    %v703 = vand.u32 2147483647, %v384
    %v704 = vand.u32 %v703, 8388607
    %v705 = vor.u32 %v704, 8388608
    %v706 = vsub.s32 0, %v705
    %v707 = vadd.s32 %v702, 1
    %vm708 = vcmp.gt.s32.totalorder %v707, 0
    %v709 = vsel %vm708, %v707, 0
    %v710 = vshrl.u32 %v709, 5
    %v711 = vand.u32 %v709, 31
    %v712 = vsub.s32 32, %v711
    %v713 = vshrl.u32 683565275, %v712
    %v714 = vshll.u32 683565275, %v711
    %v715 = vshrl.u32 2475754826, %v712
    %v716 = vor.u32 %v714, %v715
    %v717 = vshll.u32 2475754826, %v711
    %v718 = vshrl.u32 2131351028, %v712
    %v719 = vor.u32 %v717, %v718
    %v720 = vshll.u32 2131351028, %v711
    %v721 = vshrl.u32 2102212464, %v712
    %v722 = vor.u32 %v720, %v721
    %v723 = vshll.u32 2102212464, %v711
    %v724 = vshrl.u32 920167782, %v712
    %v725 = vor.u32 %v723, %v724
    %v726 = vshll.u32 920167782, %v711
    %v727 = vshrl.u32 1326507024, %v712
    %v728 = vor.u32 %v726, %v727
    %vm729 = vcmp.lt.s32.totalorder %v710, 1
    %vm730 = vcmp.lt.s32.totalorder %v710, 2
    %vm731 = vcmp.lt.s32.totalorder %v710, 3
    %vm732 = vcmp.lt.s32.totalorder %v710, 4
    %v733 = vsel %vm729, %v713, %v716
    %v734 = vsel %vm732, %v722, 2102212464
    %v735 = vsel %vm731, %v719, %v734
    %v736 = vsel %vm730, %v733, %v735
    %v737 = vsel %vm729, %v716, %v719
    %v738 = vsel %vm732, %v725, 920167782
    %v739 = vsel %vm731, %v722, %v738
    %v740 = vsel %vm730, %v737, %v739
    %v741 = vsel %vm729, %v719, %v722
    %v742 = vsel %vm732, %v728, 1326507024
    %v743 = vsel %vm731, %v725, %v742
    %v744 = vsel %vm730, %v741, %v743
    %v745 = vshll.u32 %v705, 8
    %v746 = vmul.u32.u64.compose %v745, %v744
    %v747 = vextract.low.u32 %v746
    %v748 = vextract.high.u32 %v746
    %v749 = vmul.u32.u64.compose %v745, %v740
    %v750 = vextract.low.u32 %v749
    %v751 = vextract.high.u32 %v749
    %v752 = vmul.u32 %v745, %v736
    %v753 = vadd.s32 %v748, %v750
    %vm754 = vc.u32 %v748, %v750
    %v755 = vadd.s32 %v751, 1
    %v756 = vsel %vm754, %v755, %v751
    %v757 = vadd.s32 %v752, %v756
    %v758 = vadd.s32 %v757, 536870912
    %v759 = vshrl.u32 %v758, 30
    %v760 = vshll.u32 %v759, 30
    %v761 = vsub.s32 %v757, %v760
    %vm762 = vcmp.lt.s32.totalorder %v761, 0
    %v763 = vsub.s32 0, %v761
    %v764 = vsel %vm762, %v763, %v761
    %v765 = vclz %v764
    %v766 = vsub.s32 %v765, 2
    %vm767 = vcmp.gt.s32.totalorder 0, %v766
    %v768 = vsel %vm767, 0, %v766
    %v769 = vsub.s32 32, %v768
    %v770 = vshll.u32 %v761, %v768
    %v771 = vshrl.u32 %v753, %v769
    %v772 = vor.u32 %v770, %v771
    %v773 = vsub.s32 4294967266, %v768
    %v774 = vadd.s32 %v773, 127
    %v775 = vshll.u32 %v774, 23
    %v776 = vor.u32 4788187, %v775
    %v777 = vand.u32 2147483647, %v776
    %v779 = vcvt.s32.f32 %v772
    %v780 = vmul.f32 %v779, %v777
    %v781 = vxor.u32 %v780, 2147483648
    %v782 = vsel %vm699, %v781, %v780
    %v783 = vsub.s32 4, %v759
    %v784 = vsel %vm699, %v783, %v759
    %v785 = vsel %vm698, %v384, %v782
    %v786 = vsel %vm698, 0, %v784
    %v787 = vcosq.f32.pop %v785
    %v788 = vsinq.f32.pop %v785
    %vm789 = vweird.f32 %v384
    %v790 = vand.u32 %v786, 3
    %vm791 = vcmp.lt.s32.totalorder %v790, 2
    %vm792 = vcmp.eq.s32.totalorder %v790, 0
    %v793 = vxor.u32 %v788, 2147483648
    %v794 = vsel %vm792, %v787, %v793
    %vm795 = vcmp.eq.s32.totalorder %v790, 2
    %v796 = vxor.u32 %v787, 2147483648
    %v797 = vsel %vm795, %v796, %v788
    %v798 = vsel %vm791, %v794, %v797
    %v799 = vsel %vm789, nan, %v798
    %v800 = vand.u32 2147483647, %v385
    %vm801 = vcmp.le.f32.partialorder %v800, 0.7853982
    %vm802 = vcmp.lt.s32.totalorder %v385, 0
    %v803 = vand.u32 %v385, 2139095040
    %v804 = vshrl.u32 %v803, 23
    %v805 = vsub.s32 %v804, 127
    %v806 = vand.u32 2147483647, %v385
    %v807 = vand.u32 %v806, 8388607
    %v808 = vor.u32 %v807, 8388608
    %v809 = vsub.s32 0, %v808
    %v810 = vadd.s32 %v805, 1
    %vm811 = vcmp.gt.s32.totalorder %v810, 0
    %v812 = vsel %vm811, %v810, 0
    %v813 = vshrl.u32 %v812, 5
    %v814 = vand.u32 %v812, 31
    %v815 = vsub.s32 32, %v814
    %v816 = vshrl.u32 683565275, %v815
    %v817 = vshll.u32 683565275, %v814
    %v818 = vshrl.u32 2475754826, %v815
    %v819 = vor.u32 %v817, %v818
    %v820 = vshll.u32 2475754826, %v814
    %v821 = vshrl.u32 2131351028, %v815
    %v822 = vor.u32 %v820, %v821
    %v823 = vshll.u32 2131351028, %v814
    %v824 = vshrl.u32 2102212464, %v815
    %v825 = vor.u32 %v823, %v824
    %v826 = vshll.u32 2102212464, %v814
    %v827 = vshrl.u32 920167782, %v815
    %v828 = vor.u32 %v826, %v827
    %v829 = vshll.u32 920167782, %v814
    %v830 = vshrl.u32 1326507024, %v815
    %v831 = vor.u32 %v829, %v830
    %vm832 = vcmp.lt.s32.totalorder %v813, 1
    %vm833 = vcmp.lt.s32.totalorder %v813, 2
    %vm834 = vcmp.lt.s32.totalorder %v813, 3
    %vm835 = vcmp.lt.s32.totalorder %v813, 4
    %v836 = vsel %vm832, %v816, %v819
    %v837 = vsel %vm835, %v825, 2102212464
    %v838 = vsel %vm834, %v822, %v837
    %v839 = vsel %vm833, %v836, %v838
    %v840 = vsel %vm832, %v819, %v822
    %v841 = vsel %vm835, %v828, 920167782
    %v842 = vsel %vm834, %v825, %v841
    %v843 = vsel %vm833, %v840, %v842
    %v844 = vsel %vm832, %v822, %v825
    %v845 = vsel %vm835, %v831, 1326507024
    %v846 = vsel %vm834, %v828, %v845
    %v847 = vsel %vm833, %v844, %v846
    %v848 = vshll.u32 %v808, 8
    %v849 = vmul.u32.u64.compose %v848, %v847
    %v850 = vextract.low.u32 %v849
    %v851 = vextract.high.u32 %v849
    %v852 = vmul.u32.u64.compose %v848, %v843
    %v853 = vextract.low.u32 %v852
    %v854 = vextract.high.u32 %v852
    %v855 = vmul.u32 %v848, %v839
    %v856 = vadd.s32 %v851, %v853
    %vm857 = vc.u32 %v851, %v853
    %v858 = vadd.s32 %v854, 1
    %v859 = vsel %vm857, %v858, %v854
    %v860 = vadd.s32 %v855, %v859
    %v861 = vadd.s32 %v860, 536870912
    %v862 = vshrl.u32 %v861, 30
    %v863 = vshll.u32 %v862, 30
    %v864 = vsub.s32 %v860, %v863
    %vm865 = vcmp.lt.s32.totalorder %v864, 0
    %v866 = vsub.s32 0, %v864
    %v867 = vsel %vm865, %v866, %v864
    %v868 = vclz %v867
    %v869 = vsub.s32 %v868, 2
    %vm870 = vcmp.gt.s32.totalorder 0, %v869
    %v871 = vsel %vm870, 0, %v869
    %v872 = vsub.s32 32, %v871
    %v873 = vshll.u32 %v864, %v871
    %v874 = vshrl.u32 %v856, %v872
    %v875 = vor.u32 %v873, %v874
    %v876 = vsub.s32 4294967266, %v871
    %v877 = vadd.s32 %v876, 127
    %v878 = vshll.u32 %v877, 23
    %v879 = vor.u32 4788187, %v878
    %v880 = vand.u32 2147483647, %v879
    %v882 = vcvt.s32.f32 %v875
    %v883 = vmul.f32 %v882, %v880
    %v884 = vxor.u32 %v883, 2147483648
    %v885 = vsel %vm802, %v884, %v883
    %v886 = vsub.s32 4, %v862
    %v887 = vsel %vm802, %v886, %v862
    %v888 = vsel %vm801, %v385, %v885
    %v889 = vsel %vm801, 0, %v887
    %v890 = vcosq.f32.pop %v888
    %v891 = vsinq.f32.pop %v888
    %vm892 = vweird.f32 %v385
    %v893 = vand.u32 %v889, 3
    %vm894 = vcmp.lt.s32.totalorder %v893, 2
    %vm895 = vcmp.eq.s32.totalorder %v893, 0
    %v896 = vxor.u32 %v891, 2147483648
    %v897 = vsel %vm895, %v890, %v896
    %vm898 = vcmp.eq.s32.totalorder %v893, 2
    %v899 = vxor.u32 %v890, 2147483648
    %v900 = vsel %vm898, %v899, %v891
    %v901 = vsel %vm894, %v897, %v900
    %v902 = vsel %vm892, nan, %v901
    %v903 = vand.u32 2147483647, %v386
    %vm904 = vcmp.le.f32.partialorder %v903, 0.7853982
    %vm905 = vcmp.lt.s32.totalorder %v386, 0
    %v906 = vand.u32 %v386, 2139095040
    %v907 = vshrl.u32 %v906, 23
    %v908 = vsub.s32 %v907, 127
    %v909 = vand.u32 2147483647, %v386
    %v910 = vand.u32 %v909, 8388607
    %v911 = vor.u32 %v910, 8388608
    %v912 = vsub.s32 0, %v911
    %v913 = vadd.s32 %v908, 1
    %vm914 = vcmp.gt.s32.totalorder %v913, 0
    %v915 = vsel %vm914, %v913, 0
    %v916 = vshrl.u32 %v915, 5
    %v917 = vand.u32 %v915, 31
    %v918 = vsub.s32 32, %v917
    %v919 = vshrl.u32 683565275, %v918
    %v920 = vshll.u32 683565275, %v917
    %v921 = vshrl.u32 2475754826, %v918
    %v922 = vor.u32 %v920, %v921
    %v923 = vshll.u32 2475754826, %v917
    %v924 = vshrl.u32 2131351028, %v918
    %v925 = vor.u32 %v923, %v924
    %v926 = vshll.u32 2131351028, %v917
    %v927 = vshrl.u32 2102212464, %v918
    %v928 = vor.u32 %v926, %v927
    %v929 = vshll.u32 2102212464, %v917
    %v930 = vshrl.u32 920167782, %v918
    %v931 = vor.u32 %v929, %v930
    %v932 = vshll.u32 920167782, %v917
    %v933 = vshrl.u32 1326507024, %v918
    %v934 = vor.u32 %v932, %v933
    %vm935 = vcmp.lt.s32.totalorder %v916, 1
    %vm936 = vcmp.lt.s32.totalorder %v916, 2
    %vm937 = vcmp.lt.s32.totalorder %v916, 3
    %vm938 = vcmp.lt.s32.totalorder %v916, 4
    %v939 = vsel %vm935, %v919, %v922
    %v940 = vsel %vm938, %v928, 2102212464
    %v941 = vsel %vm937, %v925, %v940
    %v942 = vsel %vm936, %v939, %v941
    %v943 = vsel %vm935, %v922, %v925
    %v944 = vsel %vm938, %v931, 920167782
    %v945 = vsel %vm937, %v928, %v944
    %v946 = vsel %vm936, %v943, %v945
    %v947 = vsel %vm935, %v925, %v928
    %v948 = vsel %vm938, %v934, 1326507024
    %v949 = vsel %vm937, %v931, %v948
    %v950 = vsel %vm936, %v947, %v949
    %v951 = vshll.u32 %v911, 8
    %v952 = vmul.u32.u64.compose %v951, %v950
    %v953 = vextract.low.u32 %v952
    %v954 = vextract.high.u32 %v952
    %v955 = vmul.u32.u64.compose %v951, %v946
    %v956 = vextract.low.u32 %v955
    %v957 = vextract.high.u32 %v955
    %v958 = vmul.u32 %v951, %v942
    %v959 = vadd.s32 %v954, %v956
    %vm960 = vc.u32 %v954, %v956
    %v961 = vadd.s32 %v957, 1
    %v962 = vsel %vm960, %v961, %v957
    %v963 = vadd.s32 %v958, %v962
    %v964 = vadd.s32 %v963, 536870912
    %v965 = vshrl.u32 %v964, 30
    %v966 = vshll.u32 %v965, 30
    %v967 = vsub.s32 %v963, %v966
    %vm968 = vcmp.lt.s32.totalorder %v967, 0
    %v969 = vsub.s32 0, %v967
    %v970 = vsel %vm968, %v969, %v967
    %v971 = vclz %v970
    %v972 = vsub.s32 %v971, 2
    %vm973 = vcmp.gt.s32.totalorder 0, %v972
    %v974 = vsel %vm973, 0, %v972
    %v975 = vsub.s32 32, %v974
    %v976 = vshll.u32 %v967, %v974
    %v977 = vshrl.u32 %v959, %v975
    %v978 = vor.u32 %v976, %v977
    %v979 = vsub.s32 4294967266, %v974
    %v980 = vadd.s32 %v979, 127
    %v981 = vshll.u32 %v980, 23
    %v982 = vor.u32 4788187, %v981
    %v983 = vand.u32 2147483647, %v982
    %v985 = vcvt.s32.f32 %v978
    %v986 = vmul.f32 %v985, %v983
    %v987 = vxor.u32 %v986, 2147483648
    %v988 = vsel %vm905, %v987, %v986
    %v989 = vsub.s32 4, %v965
    %v990 = vsel %vm905, %v989, %v965
    %v991 = vsel %vm904, %v386, %v988
    %v992 = vsel %vm904, 0, %v990
    %v993 = vcosq.f32.pop %v991
    %v994 = vsinq.f32.pop %v991
    %vm995 = vweird.f32 %v386
    %v996 = vand.u32 %v992, 3
    %vm997 = vcmp.lt.s32.totalorder %v996, 2
    %vm998 = vcmp.eq.s32.totalorder %v996, 0
    %v999 = vxor.u32 %v994, 2147483648
    %v1000 = vsel %vm998, %v993, %v999
    %vm1001 = vcmp.eq.s32.totalorder %v996, 2
    %v1002 = vxor.u32 %v993, 2147483648
    %v1003 = vsel %vm1001, %v1002, %v994
    %v1004 = vsel %vm997, %v1000, %v1003
    %v1005 = vsel %vm995, nan, %v1004
    %v1006 = vand.u32 2147483647, %v387
    %vm1007 = vcmp.le.f32.partialorder %v1006, 0.7853982
    %vm1008 = vcmp.lt.s32.totalorder %v387, 0
    %v1009 = vand.u32 %v387, 2139095040
    %v1010 = vshrl.u32 %v1009, 23
    %v1011 = vsub.s32 %v1010, 127
    %v1012 = vand.u32 2147483647, %v387
    %v1013 = vand.u32 %v1012, 8388607
    %v1014 = vor.u32 %v1013, 8388608
    %v1015 = vsub.s32 0, %v1014
    %v1016 = vadd.s32 %v1011, 1
    %vm1017 = vcmp.gt.s32.totalorder %v1016, 0
    %v1018 = vsel %vm1017, %v1016, 0
    %v1019 = vshrl.u32 %v1018, 5
    %v1020 = vand.u32 %v1018, 31
    %v1021 = vsub.s32 32, %v1020
    %v1022 = vshrl.u32 683565275, %v1021
    %v1023 = vshll.u32 683565275, %v1020
    %v1024 = vshrl.u32 2475754826, %v1021
    %v1025 = vor.u32 %v1023, %v1024
    %v1026 = vshll.u32 2475754826, %v1020
    %v1027 = vshrl.u32 2131351028, %v1021
    %v1028 = vor.u32 %v1026, %v1027
    %v1029 = vshll.u32 2131351028, %v1020
    %v1030 = vshrl.u32 2102212464, %v1021
    %v1031 = vor.u32 %v1029, %v1030
    %v1032 = vshll.u32 2102212464, %v1020
    %v1033 = vshrl.u32 920167782, %v1021
    %v1034 = vor.u32 %v1032, %v1033
    %v1035 = vshll.u32 920167782, %v1020
    %v1036 = vshrl.u32 1326507024, %v1021
    %v1037 = vor.u32 %v1035, %v1036
    %vm1038 = vcmp.lt.s32.totalorder %v1019, 1
    %vm1039 = vcmp.lt.s32.totalorder %v1019, 2
    %vm1040 = vcmp.lt.s32.totalorder %v1019, 3
    %vm1041 = vcmp.lt.s32.totalorder %v1019, 4
    %v1042 = vsel %vm1038, %v1022, %v1025
    %v1043 = vsel %vm1041, %v1031, 2102212464
    %v1044 = vsel %vm1040, %v1028, %v1043
    %v1045 = vsel %vm1039, %v1042, %v1044
    %v1046 = vsel %vm1038, %v1025, %v1028
    %v1047 = vsel %vm1041, %v1034, 920167782
    %v1048 = vsel %vm1040, %v1031, %v1047
    %v1049 = vsel %vm1039, %v1046, %v1048
    %v1050 = vsel %vm1038, %v1028, %v1031
    %v1051 = vsel %vm1041, %v1037, 1326507024
    %v1052 = vsel %vm1040, %v1034, %v1051
    %v1053 = vsel %vm1039, %v1050, %v1052
    %v1054 = vshll.u32 %v1014, 8
    %v1055 = vmul.u32.u64.compose %v1054, %v1053
    %v1056 = vextract.low.u32 %v1055
    %v1057 = vextract.high.u32 %v1055
    %v1058 = vmul.u32.u64.compose %v1054, %v1049
    %v1059 = vextract.low.u32 %v1058
    %v1060 = vextract.high.u32 %v1058
    %v1061 = vmul.u32 %v1054, %v1045
    %v1062 = vadd.s32 %v1057, %v1059
    %vm1063 = vc.u32 %v1057, %v1059
    %v1064 = vadd.s32 %v1060, 1
    %v1065 = vsel %vm1063, %v1064, %v1060
    %v1066 = vadd.s32 %v1061, %v1065
    %v1067 = vadd.s32 %v1066, 536870912
    %v1068 = vshrl.u32 %v1067, 30
    %v1069 = vshll.u32 %v1068, 30
    %v1070 = vsub.s32 %v1066, %v1069
    %vm1071 = vcmp.lt.s32.totalorder %v1070, 0
    %v1072 = vsub.s32 0, %v1070
    %v1073 = vsel %vm1071, %v1072, %v1070
    %v1074 = vclz %v1073
    %v1075 = vsub.s32 %v1074, 2
    %vm1076 = vcmp.gt.s32.totalorder 0, %v1075
    %v1077 = vsel %vm1076, 0, %v1075
    %v1078 = vsub.s32 32, %v1077
    %v1079 = vshll.u32 %v1070, %v1077
    %v1080 = vshrl.u32 %v1062, %v1078
    %v1081 = vor.u32 %v1079, %v1080
    %v1082 = vsub.s32 4294967266, %v1077
    %v1083 = vadd.s32 %v1082, 127
    %v1084 = vshll.u32 %v1083, 23
    %v1085 = vor.u32 4788187, %v1084
    %v1086 = vand.u32 2147483647, %v1085
    %v1088 = vcvt.s32.f32 %v1081
    %v1089 = vmul.f32 %v1088, %v1086
    %v1090 = vxor.u32 %v1089, 2147483648
    %v1091 = vsel %vm1008, %v1090, %v1089
    %v1092 = vsub.s32 4, %v1068
    %v1093 = vsel %vm1008, %v1092, %v1068
    %v1094 = vsel %vm1007, %v387, %v1091
    %v1095 = vsel %vm1007, 0, %v1093
    %v1096 = vcosq.f32.pop %v1094
    %v1097 = vsinq.f32.pop %v1094
    %vm1098 = vweird.f32 %v387
    %v1099 = vand.u32 %v1095, 3
    %vm1100 = vcmp.lt.s32.totalorder %v1099, 2
    %vm1101 = vcmp.eq.s32.totalorder %v1099, 0
    %v1102 = vxor.u32 %v1097, 2147483648
    %v1103 = vsel %vm1101, %v1096, %v1102
    %vm1104 = vcmp.eq.s32.totalorder %v1099, 2
    %v1105 = vxor.u32 %v1096, 2147483648
    %v1106 = vsel %vm1104, %v1105, %v1097
    %v1107 = vsel %vm1100, %v1103, %v1106
    %v1108 = vsel %vm1098, nan, %v1107
    %v1109 = vld [vmem:[%s3] sm:$0xff]
    %v1110 = vld [vmem:[%s3 + $0x8] sm:$0xff]
    %v1111 = vld [vmem:[%s3 + $0x10] sm:$0xff]
    %v1112 = vld [vmem:[%s3 + $0x18] sm:$0xff]
    %v1113 = vld [vmem:[%s3 + $0x20] sm:$0xff]
    %v1114 = vld [vmem:[%s3 + $0x28] sm:$0xff]
    %v1115 = vld [vmem:[%s3 + $0x30] sm:$0x3]
    %v1116 = vld [vmem:[%s4] sm:$0xff]
    %v1117 = vld [vmem:[%s4 + $0x8] sm:$0xff]
    %v1118 = vld [vmem:[%s4 + $0x10] sm:$0xff]
    %v1119 = vld [vmem:[%s4 + $0x18] sm:$0xff]
    %v1120 = vld [vmem:[%s4 + $0x20] sm:$0xff]
    %v1121 = vld [vmem:[%s4 + $0x28] sm:$0xff]
    %v1122 = vld [vmem:[%s4 + $0x30] sm:$0x3]
    %1124 = vset.pattern.permute.xlu0 0
    %1125 = vperm.xlu0 %1124, %v1116
    %v1126 = vpop.permute.xlu0 %1125
    %1129 = vset.pattern.permute.xlu0 0
    %1130 = vperm.xlu0 %1129, %v1117
    %v1131 = vpop.permute.xlu0 %1130
    %1134 = vset.pattern.permute.xlu0 0
    %1135 = vperm.xlu0 %1134, %v1118
    %v1136 = vpop.permute.xlu0 %1135
    %1139 = vset.pattern.permute.xlu0 0
    %1140 = vperm.xlu0 %1139, %v1119
    %v1141 = vpop.permute.xlu0 %1140
    %1144 = vset.pattern.permute.xlu0 0
    %1145 = vperm.xlu0 %1144, %v1120
    %v1146 = vpop.permute.xlu0 %1145
    %1149 = vset.pattern.permute.xlu0 0
    %1150 = vperm.xlu0 %1149, %v1121
    %v1151 = vpop.permute.xlu0 %1150
    %1154 = vset.pattern.permute.xlu0 0
    %1155 = vperm.xlu0 %1154, %v1122
    %v1156 = vpop.permute.xlu0 %1155
    %vm1158 = vcmask 408576
    %v1160 = vsel %vm1158, %v1109, 0
    %v1163 = vsel %vm1158, %v1110, 0
    %v1166 = vsel %vm1158, %v1111, 0
    %v1169 = vsel %vm1158, %v1112, 0
    %v1172 = vsel %vm1158, %v1113, 0
    %v1175 = vsel %vm1158, %v1114, 0
    %v1178 = vsel %vm1158, %v1115, 0
    %vm1180 = vcmask 1041408
    %v1182 = vsel %vm1180, %v1108, 0
    %1184 = vmatprep.subr.mxu0 0.0
    %1185 = vmatpush1.msra.mxu0 %v490
    %1186 = vmatprep.subr.mxu0 0.0
    %1187 = vmatpush1.msra.mxu0 %v593
    %1188 = vmatprep.subr.mxu0 0.0
    %1189 = vmatpush1.msra.mxu0 %v696
    %1190 = vmatprep.subr.mxu0 0.0
    %1191 = vmatpush1.msra.mxu0 %v799
    %1192 = vmatprep.subr.mxu0 0.0
    %1193 = vmatpush1.msra.mxu0 %v902
    %1194 = vmatprep.subr.mxu0 0.0
    %1195 = vmatpush1.msra.mxu0 %v1005
    %1196 = vmatprep.subr.mxu0 0.0
    %1197 = vmatpush1.msra.mxu0 %v1182
    %1198 = vmatprep.subr.mxu0 0.0
    %1199 = vmatpush1.msra.mxu0 0.0
    %1200 = vmatprep.subr.mxu0 0.0
    %1201 = vmatpush1.msra.mxu0 0.0
    %1202 = vmatprep.subr.mxu0 0.0
    %1203 = vmatpush1.msra.mxu0 0.0
    %1204 = vmatprep.subr.mxu0 0.0
    %1205 = vmatpush1.msra.mxu0 0.0
    %1206 = vmatprep.subr.mxu0 0.0
    %1207 = vmatpush1.msra.mxu0 0.0
    %1208 = vmatprep.subr.mxu0 0.0
    %1209 = vmatpush1.msra.mxu0 0.0
    %1210 = vmatprep.subr.mxu0 0.0
    %1211 = vmatpush1.msra.mxu0 0.0
    %1212 = vmatprep.subr.mxu0 0.0
    %1213 = vmatpush1.msra.mxu0 0.0
    %1214 = vmatprep.subr.mxu0 0.0
    %1215 = vmatpush1.msra.mxu0 0.0
    %1216 = vmatprep.subr.mxu0 0.0
    %1217 = vmatpush1.msra.mxu0 0.0
    %1218 = vmatprep.subr.mxu0 0.0
    %1219 = vmatpush1.msra.mxu0 0.0
    %1220 = vmatprep.subr.mxu0 0.0
    %1221 = vmatpush1.msra.mxu0 0.0
    %1222 = vmatprep.subr.mxu0 0.0
    %1223 = vmatpush1.msra.mxu0 0.0
    %1224 = vmatprep.subr.mxu0 0.0
    %1225 = vmatpush1.msra.mxu0 0.0
    %1226 = vmatprep.subr.mxu0 0.0
    %1227 = vmatpush1.msra.mxu0 0.0
    %1228 = vmatprep.subr.mxu0 0.0
    %1229 = vmatpush1.msra.mxu0 0.0
    %1230 = vmatprep.subr.mxu0 0.0
    %1231 = vmatpush1.msra.mxu0 0.0
    %1232 = vmatprep.subr.mxu0 0.0
    %1233 = vmatpush1.msra.mxu0 0.0
    %1234 = vmatprep.subr.mxu0 0.0
    %1235 = vmatpush1.msra.mxu0 0.0
    %1236 = vmatprep.subr.mxu0 0.0
    %1237 = vmatpush1.msra.mxu0 0.0
    %1238 = vmatprep.subr.mxu0 0.0
    %1239 = vmatpush1.msra.mxu0 0.0
    %1240 = vmatprep.subr.mxu0 0.0
    %1241 = vmatpush1.msra.mxu0 0.0
    %1242 = vmatprep.subr.mxu0 0.0
    %1243 = vmatpush1.msra.mxu0 0.0
    %1244 = vmatprep.subr.mxu0 0.0
    %1245 = vmatpush1.msra.mxu0 0.0
    %1246 = vmatprep.subr.mxu0 0.0
    %1247 = vmatpush1.msra.mxu0 0.0
    %1248 = vmatprep.mubr.f32.mxu0 0.0
    %1249 = vmatmul.mubr.f32.gmra.mrb[0].mxu0 %v1160
    %v1250 = vpop.f32.mrb[0].mxu0
    %v1251 = vadd.f32 %v1126, %v1250
    %v1252 = vpop.f32.mrb[0].mxu0
    %1253 = vmatprep.mubr.f32.mxu0 0.0
    %1254 = vmatmul.mubr.f32.gmra.mrb[0].mxu0 %v1163
    %v1255 = vpop.f32.mrb[0].mxu0
    %v1256 = vadd.f32 %v1131, %v1255
    %v1257 = vpop.f32.mrb[0].mxu0
    %1258 = vmatprep.mubr.f32.mxu0 0.0
    %1259 = vmatmul.mubr.f32.gmra.mrb[0].mxu0 %v1166
    %v1260 = vpop.f32.mrb[0].mxu0
    %v1261 = vadd.f32 %v1136, %v1260
    %v1262 = vpop.f32.mrb[0].mxu0
    %1263 = vmatprep.mubr.f32.mxu0 0.0
    %1264 = vmatmul.mubr.f32.gmra.mrb[0].mxu0 %v1169
    %v1265 = vpop.f32.mrb[0].mxu0
    %v1266 = vadd.f32 %v1141, %v1265
    %v1267 = vpop.f32.mrb[0].mxu0
    %1268 = vmatprep.mubr.f32.mxu0 0.0
    %1269 = vmatmul.mubr.f32.gmra.mrb[0].mxu0 %v1172
    %v1270 = vpop.f32.mrb[0].mxu0
    %v1271 = vadd.f32 %v1146, %v1270
    %v1272 = vpop.f32.mrb[0].mxu0
    %1273 = vmatprep.mubr.f32.mxu0 0.0
    %1274 = vmatmul.mubr.f32.gmra.mrb[0].mxu0 %v1175
    %v1275 = vpop.f32.mrb[0].mxu0
    %v1276 = vadd.f32 %v1151, %v1275
    %v1277 = vpop.f32.mrb[0].mxu0
    %1278 = vmatprep.mubr.f32.mxu0 0.0
    %1279 = vmatmul.mubr.f32.gmra.mrb[0].mxu0 %v1178
    %v1280 = vpop.f32.mrb[0].mxu0
    %v1281 = vadd.f32 %v1156, %v1280
    %v1282 = vpop.f32.mrb[0].mxu0
    %1283 = vdwg.mxu0
    %v1284 = vand.u32 2147483647, %v1251
    %vm1285 = vcmp.le.f32.partialorder %v1284, 0.7853982
    %vm1286 = vcmp.lt.s32.totalorder %v1251, 0
    %v1287 = vand.u32 %v1251, 2139095040
    %v1288 = vshrl.u32 %v1287, 23
    %v1289 = vsub.s32 %v1288, 127
    %v1290 = vand.u32 2147483647, %v1251
    %v1291 = vand.u32 %v1290, 8388607
    %v1292 = vor.u32 %v1291, 8388608
    %v1293 = vsub.s32 0, %v1292
    %v1294 = vadd.s32 %v1289, 1
    %vm1295 = vcmp.gt.s32.totalorder %v1294, 0
    %v1296 = vsel %vm1295, %v1294, 0
    %v1297 = vshrl.u32 %v1296, 5
    %v1298 = vand.u32 %v1296, 31
    %v1299 = vsub.s32 32, %v1298
    %v1300 = vshrl.u32 683565275, %v1299
    %v1301 = vshll.u32 683565275, %v1298
    %v1302 = vshrl.u32 2475754826, %v1299
    %v1303 = vor.u32 %v1301, %v1302
    %v1304 = vshll.u32 2475754826, %v1298
    %v1305 = vshrl.u32 2131351028, %v1299
    %v1306 = vor.u32 %v1304, %v1305
    %v1307 = vshll.u32 2131351028, %v1298
    %v1308 = vshrl.u32 2102212464, %v1299
    %v1309 = vor.u32 %v1307, %v1308
    %v1310 = vshll.u32 2102212464, %v1298
    %v1311 = vshrl.u32 920167782, %v1299
    %v1312 = vor.u32 %v1310, %v1311
    %v1313 = vshll.u32 920167782, %v1298
    %v1314 = vshrl.u32 1326507024, %v1299
    %v1315 = vor.u32 %v1313, %v1314
    %vm1316 = vcmp.lt.s32.totalorder %v1297, 1
    %vm1317 = vcmp.lt.s32.totalorder %v1297, 2
    %vm1318 = vcmp.lt.s32.totalorder %v1297, 3
    %vm1319 = vcmp.lt.s32.totalorder %v1297, 4
    %v1320 = vsel %vm1316, %v1300, %v1303
    %v1321 = vsel %vm1319, %v1309, 2102212464
    %v1322 = vsel %vm1318, %v1306, %v1321
    %v1323 = vsel %vm1317, %v1320, %v1322
    %v1324 = vsel %vm1316, %v1303, %v1306
    %v1325 = vsel %vm1319, %v1312, 920167782
    %v1326 = vsel %vm1318, %v1309, %v1325
    %v1327 = vsel %vm1317, %v1324, %v1326
    %v1328 = vsel %vm1316, %v1306, %v1309
    %v1329 = vsel %vm1319, %v1315, 1326507024
    %v1330 = vsel %vm1318, %v1312, %v1329
    %v1331 = vsel %vm1317, %v1328, %v1330
    %v1332 = vshll.u32 %v1292, 8
    %v1333 = vmul.u32.u64.compose %v1332, %v1331
    %v1334 = vextract.low.u32 %v1333
    %v1335 = vextract.high.u32 %v1333
    %v1336 = vmul.u32.u64.compose %v1332, %v1327
    %v1337 = vextract.low.u32 %v1336
    %v1338 = vextract.high.u32 %v1336
    %v1339 = vmul.u32 %v1332, %v1323
    %v1340 = vadd.s32 %v1335, %v1337
    %vm1341 = vc.u32 %v1335, %v1337
    %v1342 = vadd.s32 %v1338, 1
    %v1343 = vsel %vm1341, %v1342, %v1338
    %v1344 = vadd.s32 %v1339, %v1343
    %v1345 = vadd.s32 %v1344, 536870912
    %v1346 = vshrl.u32 %v1345, 30
    %v1347 = vshll.u32 %v1346, 30
    %v1348 = vsub.s32 %v1344, %v1347
    %vm1349 = vcmp.lt.s32.totalorder %v1348, 0
    %v1350 = vsub.s32 0, %v1348
    %v1351 = vsel %vm1349, %v1350, %v1348
    %v1352 = vclz %v1351
    %v1353 = vsub.s32 %v1352, 2
    %vm1354 = vcmp.gt.s32.totalorder 0, %v1353
    %v1355 = vsel %vm1354, 0, %v1353
    %v1356 = vsub.s32 32, %v1355
    %v1357 = vshll.u32 %v1348, %v1355
    %v1358 = vshrl.u32 %v1340, %v1356
    %v1359 = vor.u32 %v1357, %v1358
    %v1360 = vsub.s32 4294967266, %v1355
    %v1361 = vadd.s32 %v1360, 127
    %v1362 = vshll.u32 %v1361, 23
    %v1363 = vor.u32 4788187, %v1362
    %v1364 = vand.u32 2147483647, %v1363
    %v1366 = vcvt.s32.f32 %v1359
    %v1367 = vmul.f32 %v1366, %v1364
    %v1368 = vxor.u32 %v1367, 2147483648
    %v1369 = vsel %vm1286, %v1368, %v1367
    %v1370 = vsub.s32 4, %v1346
    %v1371 = vsel %vm1286, %v1370, %v1346
    %v1372 = vsel %vm1285, %v1251, %v1369
    %v1373 = vsel %vm1285, 0, %v1371
    %v1374 = vcosq.f32.pop %v1372
    %v1375 = vsinq.f32.pop %v1372
    %vm1376 = vweird.f32 %v1251
    %v1377 = vand.u32 %v1373, 3
    %vm1378 = vcmp.lt.s32.totalorder %v1377, 2
    %vm1379 = vcmp.eq.s32.totalorder %v1377, 0
    %v1380 = vxor.u32 %v1375, 2147483648
    %v1381 = vsel %vm1379, %v1374, %v1380
    %vm1382 = vcmp.eq.s32.totalorder %v1377, 2
    %v1383 = vxor.u32 %v1374, 2147483648
    %v1384 = vsel %vm1382, %v1383, %v1375
    %v1385 = vsel %vm1378, %v1381, %v1384
    %v1386 = vsel %vm1376, nan, %v1385
    %v1387 = vand.u32 2147483647, %v1256
    %vm1388 = vcmp.le.f32.partialorder %v1387, 0.7853982
    %vm1389 = vcmp.lt.s32.totalorder %v1256, 0
    %v1390 = vand.u32 %v1256, 2139095040
    %v1391 = vshrl.u32 %v1390, 23
    %v1392 = vsub.s32 %v1391, 127
    %v1393 = vand.u32 2147483647, %v1256
    %v1394 = vand.u32 %v1393, 8388607
    %v1395 = vor.u32 %v1394, 8388608
    %v1396 = vsub.s32 0, %v1395
    %v1397 = vadd.s32 %v1392, 1
    %vm1398 = vcmp.gt.s32.totalorder %v1397, 0
    %v1399 = vsel %vm1398, %v1397, 0
    %v1400 = vshrl.u32 %v1399, 5
    %v1401 = vand.u32 %v1399, 31
    %v1402 = vsub.s32 32, %v1401
    %v1403 = vshrl.u32 683565275, %v1402
    %v1404 = vshll.u32 683565275, %v1401
    %v1405 = vshrl.u32 2475754826, %v1402
    %v1406 = vor.u32 %v1404, %v1405
    %v1407 = vshll.u32 2475754826, %v1401
    %v1408 = vshrl.u32 2131351028, %v1402
    %v1409 = vor.u32 %v1407, %v1408
    %v1410 = vshll.u32 2131351028, %v1401
    %v1411 = vshrl.u32 2102212464, %v1402
    %v1412 = vor.u32 %v1410, %v1411
    %v1413 = vshll.u32 2102212464, %v1401
    %v1414 = vshrl.u32 920167782, %v1402
    %v1415 = vor.u32 %v1413, %v1414
    %v1416 = vshll.u32 920167782, %v1401
    %v1417 = vshrl.u32 1326507024, %v1402
    %v1418 = vor.u32 %v1416, %v1417
    %vm1419 = vcmp.lt.s32.totalorder %v1400, 1
    %vm1420 = vcmp.lt.s32.totalorder %v1400, 2
    %vm1421 = vcmp.lt.s32.totalorder %v1400, 3
    %vm1422 = vcmp.lt.s32.totalorder %v1400, 4
    %v1423 = vsel %vm1419, %v1403, %v1406
    %v1424 = vsel %vm1422, %v1412, 2102212464
    %v1425 = vsel %vm1421, %v1409, %v1424
    %v1426 = vsel %vm1420, %v1423, %v1425
    %v1427 = vsel %vm1419, %v1406, %v1409
    %v1428 = vsel %vm1422, %v1415, 920167782
    %v1429 = vsel %vm1421, %v1412, %v1428
    %v1430 = vsel %vm1420, %v1427, %v1429
    %v1431 = vsel %vm1419, %v1409, %v1412
    %v1432 = vsel %vm1422, %v1418, 1326507024
    %v1433 = vsel %vm1421, %v1415, %v1432
    %v1434 = vsel %vm1420, %v1431, %v1433
    %v1435 = vshll.u32 %v1395, 8
    %v1436 = vmul.u32.u64.compose %v1435, %v1434
    %v1437 = vextract.low.u32 %v1436
    %v1438 = vextract.high.u32 %v1436
    %v1439 = vmul.u32.u64.compose %v1435, %v1430
    %v1440 = vextract.low.u32 %v1439
    %v1441 = vextract.high.u32 %v1439
    %v1442 = vmul.u32 %v1435, %v1426
    %v1443 = vadd.s32 %v1438, %v1440
    %vm1444 = vc.u32 %v1438, %v1440
    %v1445 = vadd.s32 %v1441, 1
    %v1446 = vsel %vm1444, %v1445, %v1441
    %v1447 = vadd.s32 %v1442, %v1446
    %v1448 = vadd.s32 %v1447, 536870912
    %v1449 = vshrl.u32 %v1448, 30
    %v1450 = vshll.u32 %v1449, 30
    %v1451 = vsub.s32 %v1447, %v1450
    %vm1452 = vcmp.lt.s32.totalorder %v1451, 0
    %v1453 = vsub.s32 0, %v1451
    %v1454 = vsel %vm1452, %v1453, %v1451
    %v1455 = vclz %v1454
    %v1456 = vsub.s32 %v1455, 2
    %vm1457 = vcmp.gt.s32.totalorder 0, %v1456
    %v1458 = vsel %vm1457, 0, %v1456
    %v1459 = vsub.s32 32, %v1458
    %v1460 = vshll.u32 %v1451, %v1458
    %v1461 = vshrl.u32 %v1443, %v1459
    %v1462 = vor.u32 %v1460, %v1461
    %v1463 = vsub.s32 4294967266, %v1458
    %v1464 = vadd.s32 %v1463, 127
    %v1465 = vshll.u32 %v1464, 23
    %v1466 = vor.u32 4788187, %v1465
    %v1467 = vand.u32 2147483647, %v1466
    %v1469 = vcvt.s32.f32 %v1462
    %v1470 = vmul.f32 %v1469, %v1467
    %v1471 = vxor.u32 %v1470, 2147483648
    %v1472 = vsel %vm1389, %v1471, %v1470
    %v1473 = vsub.s32 4, %v1449
    %v1474 = vsel %vm1389, %v1473, %v1449
    %v1475 = vsel %vm1388, %v1256, %v1472
    %v1476 = vsel %vm1388, 0, %v1474
    %v1477 = vcosq.f32.pop %v1475
    %v1478 = vsinq.f32.pop %v1475
    %vm1479 = vweird.f32 %v1256
    %v1480 = vand.u32 %v1476, 3
    %vm1481 = vcmp.lt.s32.totalorder %v1480, 2
    %vm1482 = vcmp.eq.s32.totalorder %v1480, 0
    %v1483 = vxor.u32 %v1478, 2147483648
    %v1484 = vsel %vm1482, %v1477, %v1483
    %vm1485 = vcmp.eq.s32.totalorder %v1480, 2
    %v1486 = vxor.u32 %v1477, 2147483648
    %v1487 = vsel %vm1485, %v1486, %v1478
    %v1488 = vsel %vm1481, %v1484, %v1487
    %v1489 = vsel %vm1479, nan, %v1488
    %v1490 = vand.u32 2147483647, %v1261
    %vm1491 = vcmp.le.f32.partialorder %v1490, 0.7853982
    %vm1492 = vcmp.lt.s32.totalorder %v1261, 0
    %v1493 = vand.u32 %v1261, 2139095040
    %v1494 = vshrl.u32 %v1493, 23
    %v1495 = vsub.s32 %v1494, 127
    %v1496 = vand.u32 2147483647, %v1261
    %v1497 = vand.u32 %v1496, 8388607
    %v1498 = vor.u32 %v1497, 8388608
    %v1499 = vsub.s32 0, %v1498
    %v1500 = vadd.s32 %v1495, 1
    %vm1501 = vcmp.gt.s32.totalorder %v1500, 0
    %v1502 = vsel %vm1501, %v1500, 0
    %v1503 = vshrl.u32 %v1502, 5
    %v1504 = vand.u32 %v1502, 31
    %v1505 = vsub.s32 32, %v1504
    %v1506 = vshrl.u32 683565275, %v1505
    %v1507 = vshll.u32 683565275, %v1504
    %v1508 = vshrl.u32 2475754826, %v1505
    %v1509 = vor.u32 %v1507, %v1508
    %v1510 = vshll.u32 2475754826, %v1504
    %v1511 = vshrl.u32 2131351028, %v1505
    %v1512 = vor.u32 %v1510, %v1511
    %v1513 = vshll.u32 2131351028, %v1504
    %v1514 = vshrl.u32 2102212464, %v1505
    %v1515 = vor.u32 %v1513, %v1514
    %v1516 = vshll.u32 2102212464, %v1504
    %v1517 = vshrl.u32 920167782, %v1505
    %v1518 = vor.u32 %v1516, %v1517
    %v1519 = vshll.u32 920167782, %v1504
    %v1520 = vshrl.u32 1326507024, %v1505
    %v1521 = vor.u32 %v1519, %v1520
    %vm1522 = vcmp.lt.s32.totalorder %v1503, 1
    %vm1523 = vcmp.lt.s32.totalorder %v1503, 2
    %vm1524 = vcmp.lt.s32.totalorder %v1503, 3
    %vm1525 = vcmp.lt.s32.totalorder %v1503, 4
    %v1526 = vsel %vm1522, %v1506, %v1509
    %v1527 = vsel %vm1525, %v1515, 2102212464
    %v1528 = vsel %vm1524, %v1512, %v1527
    %v1529 = vsel %vm1523, %v1526, %v1528
    %v1530 = vsel %vm1522, %v1509, %v1512
    %v1531 = vsel %vm1525, %v1518, 920167782
    %v1532 = vsel %vm1524, %v1515, %v1531
    %v1533 = vsel %vm1523, %v1530, %v1532
    %v1534 = vsel %vm1522, %v1512, %v1515
    %v1535 = vsel %vm1525, %v1521, 1326507024
    %v1536 = vsel %vm1524, %v1518, %v1535
    %v1537 = vsel %vm1523, %v1534, %v1536
    %v1538 = vshll.u32 %v1498, 8
    %v1539 = vmul.u32.u64.compose %v1538, %v1537
    %v1540 = vextract.low.u32 %v1539
    %v1541 = vextract.high.u32 %v1539
    %v1542 = vmul.u32.u64.compose %v1538, %v1533
    %v1543 = vextract.low.u32 %v1542
    %v1544 = vextract.high.u32 %v1542
    %v1545 = vmul.u32 %v1538, %v1529
    %v1546 = vadd.s32 %v1541, %v1543
    %vm1547 = vc.u32 %v1541, %v1543
    %v1548 = vadd.s32 %v1544, 1
    %v1549 = vsel %vm1547, %v1548, %v1544
    %v1550 = vadd.s32 %v1545, %v1549
    %v1551 = vadd.s32 %v1550, 536870912
    %v1552 = vshrl.u32 %v1551, 30
    %v1553 = vshll.u32 %v1552, 30
    %v1554 = vsub.s32 %v1550, %v1553
    %vm1555 = vcmp.lt.s32.totalorder %v1554, 0
    %v1556 = vsub.s32 0, %v1554
    %v1557 = vsel %vm1555, %v1556, %v1554
    %v1558 = vclz %v1557
    %v1559 = vsub.s32 %v1558, 2
    %vm1560 = vcmp.gt.s32.totalorder 0, %v1559
    %v1561 = vsel %vm1560, 0, %v1559
    %v1562 = vsub.s32 32, %v1561
    %v1563 = vshll.u32 %v1554, %v1561
    %v1564 = vshrl.u32 %v1546, %v1562
    %v1565 = vor.u32 %v1563, %v1564
    %v1566 = vsub.s32 4294967266, %v1561
    %v1567 = vadd.s32 %v1566, 127
    %v1568 = vshll.u32 %v1567, 23
    %v1569 = vor.u32 4788187, %v1568
    %v1570 = vand.u32 2147483647, %v1569
    %v1572 = vcvt.s32.f32 %v1565
    %v1573 = vmul.f32 %v1572, %v1570
    %v1574 = vxor.u32 %v1573, 2147483648
    %v1575 = vsel %vm1492, %v1574, %v1573
    %v1576 = vsub.s32 4, %v1552
    %v1577 = vsel %vm1492, %v1576, %v1552
    %v1578 = vsel %vm1491, %v1261, %v1575
    %v1579 = vsel %vm1491, 0, %v1577
    %v1580 = vcosq.f32.pop %v1578
    %v1581 = vsinq.f32.pop %v1578
    %vm1582 = vweird.f32 %v1261
    %v1583 = vand.u32 %v1579, 3
    %vm1584 = vcmp.lt.s32.totalorder %v1583, 2
    %vm1585 = vcmp.eq.s32.totalorder %v1583, 0
    %v1586 = vxor.u32 %v1581, 2147483648
    %v1587 = vsel %vm1585, %v1580, %v1586
    %vm1588 = vcmp.eq.s32.totalorder %v1583, 2
    %v1589 = vxor.u32 %v1580, 2147483648
    %v1590 = vsel %vm1588, %v1589, %v1581
    %v1591 = vsel %vm1584, %v1587, %v1590
    %v1592 = vsel %vm1582, nan, %v1591
    %v1593 = vand.u32 2147483647, %v1266
    %vm1594 = vcmp.le.f32.partialorder %v1593, 0.7853982
    %vm1595 = vcmp.lt.s32.totalorder %v1266, 0
    %v1596 = vand.u32 %v1266, 2139095040
    %v1597 = vshrl.u32 %v1596, 23
    %v1598 = vsub.s32 %v1597, 127
    %v1599 = vand.u32 2147483647, %v1266
    %v1600 = vand.u32 %v1599, 8388607
    %v1601 = vor.u32 %v1600, 8388608
    %v1602 = vsub.s32 0, %v1601
    %v1603 = vadd.s32 %v1598, 1
    %vm1604 = vcmp.gt.s32.totalorder %v1603, 0
    %v1605 = vsel %vm1604, %v1603, 0
    %v1606 = vshrl.u32 %v1605, 5
    %v1607 = vand.u32 %v1605, 31
    %v1608 = vsub.s32 32, %v1607
    %v1609 = vshrl.u32 683565275, %v1608
    %v1610 = vshll.u32 683565275, %v1607
    %v1611 = vshrl.u32 2475754826, %v1608
    %v1612 = vor.u32 %v1610, %v1611
    %v1613 = vshll.u32 2475754826, %v1607
    %v1614 = vshrl.u32 2131351028, %v1608
    %v1615 = vor.u32 %v1613, %v1614
    %v1616 = vshll.u32 2131351028, %v1607
    %v1617 = vshrl.u32 2102212464, %v1608
    %v1618 = vor.u32 %v1616, %v1617
    %v1619 = vshll.u32 2102212464, %v1607
    %v1620 = vshrl.u32 920167782, %v1608
    %v1621 = vor.u32 %v1619, %v1620
    %v1622 = vshll.u32 920167782, %v1607
    %v1623 = vshrl.u32 1326507024, %v1608
    %v1624 = vor.u32 %v1622, %v1623
    %vm1625 = vcmp.lt.s32.totalorder %v1606, 1
    %vm1626 = vcmp.lt.s32.totalorder %v1606, 2
    %vm1627 = vcmp.lt.s32.totalorder %v1606, 3
    %vm1628 = vcmp.lt.s32.totalorder %v1606, 4
    %v1629 = vsel %vm1625, %v1609, %v1612
    %v1630 = vsel %vm1628, %v1618, 2102212464
    %v1631 = vsel %vm1627, %v1615, %v1630
    %v1632 = vsel %vm1626, %v1629, %v1631
    %v1633 = vsel %vm1625, %v1612, %v1615
    %v1634 = vsel %vm1628, %v1621, 920167782
    %v1635 = vsel %vm1627, %v1618, %v1634
    %v1636 = vsel %vm1626, %v1633, %v1635
    %v1637 = vsel %vm1625, %v1615, %v1618
    %v1638 = vsel %vm1628, %v1624, 1326507024
    %v1639 = vsel %vm1627, %v1621, %v1638
    %v1640 = vsel %vm1626, %v1637, %v1639
    %v1641 = vshll.u32 %v1601, 8
    %v1642 = vmul.u32.u64.compose %v1641, %v1640
    %v1643 = vextract.low.u32 %v1642
    %v1644 = vextract.high.u32 %v1642
    %v1645 = vmul.u32.u64.compose %v1641, %v1636
    %v1646 = vextract.low.u32 %v1645
    %v1647 = vextract.high.u32 %v1645
    %v1648 = vmul.u32 %v1641, %v1632
    %v1649 = vadd.s32 %v1644, %v1646
    %vm1650 = vc.u32 %v1644, %v1646
    %v1651 = vadd.s32 %v1647, 1
    %v1652 = vsel %vm1650, %v1651, %v1647
    %v1653 = vadd.s32 %v1648, %v1652
    %v1654 = vadd.s32 %v1653, 536870912
    %v1655 = vshrl.u32 %v1654, 30
    %v1656 = vshll.u32 %v1655, 30
    %v1657 = vsub.s32 %v1653, %v1656
    %vm1658 = vcmp.lt.s32.totalorder %v1657, 0
    %v1659 = vsub.s32 0, %v1657
    %v1660 = vsel %vm1658, %v1659, %v1657
    %v1661 = vclz %v1660
    %v1662 = vsub.s32 %v1661, 2
    %vm1663 = vcmp.gt.s32.totalorder 0, %v1662
    %v1664 = vsel %vm1663, 0, %v1662
    %v1665 = vsub.s32 32, %v1664
    %v1666 = vshll.u32 %v1657, %v1664
    %v1667 = vshrl.u32 %v1649, %v1665
    %v1668 = vor.u32 %v1666, %v1667
    %v1669 = vsub.s32 4294967266, %v1664
    %v1670 = vadd.s32 %v1669, 127
    %v1671 = vshll.u32 %v1670, 23
    %v1672 = vor.u32 4788187, %v1671
    %v1673 = vand.u32 2147483647, %v1672
    %v1675 = vcvt.s32.f32 %v1668
    %v1676 = vmul.f32 %v1675, %v1673
    %v1677 = vxor.u32 %v1676, 2147483648
    %v1678 = vsel %vm1595, %v1677, %v1676
    %v1679 = vsub.s32 4, %v1655
    %v1680 = vsel %vm1595, %v1679, %v1655
    %v1681 = vsel %vm1594, %v1266, %v1678
    %v1682 = vsel %vm1594, 0, %v1680
    %v1683 = vcosq.f32.pop %v1681
    %v1684 = vsinq.f32.pop %v1681
    %vm1685 = vweird.f32 %v1266
    %v1686 = vand.u32 %v1682, 3
    %vm1687 = vcmp.lt.s32.totalorder %v1686, 2
    %vm1688 = vcmp.eq.s32.totalorder %v1686, 0
    %v1689 = vxor.u32 %v1684, 2147483648
    %v1690 = vsel %vm1688, %v1683, %v1689
    %vm1691 = vcmp.eq.s32.totalorder %v1686, 2
    %v1692 = vxor.u32 %v1683, 2147483648
    %v1693 = vsel %vm1691, %v1692, %v1684
    %v1694 = vsel %vm1687, %v1690, %v1693
    %v1695 = vsel %vm1685, nan, %v1694
    %v1696 = vand.u32 2147483647, %v1271
    %vm1697 = vcmp.le.f32.partialorder %v1696, 0.7853982
    %vm1698 = vcmp.lt.s32.totalorder %v1271, 0
    %v1699 = vand.u32 %v1271, 2139095040
    %v1700 = vshrl.u32 %v1699, 23
    %v1701 = vsub.s32 %v1700, 127
    %v1702 = vand.u32 2147483647, %v1271
    %v1703 = vand.u32 %v1702, 8388607
    %v1704 = vor.u32 %v1703, 8388608
    %v1705 = vsub.s32 0, %v1704
    %v1706 = vadd.s32 %v1701, 1
    %vm1707 = vcmp.gt.s32.totalorder %v1706, 0
    %v1708 = vsel %vm1707, %v1706, 0
    %v1709 = vshrl.u32 %v1708, 5
    %v1710 = vand.u32 %v1708, 31
    %v1711 = vsub.s32 32, %v1710
    %v1712 = vshrl.u32 683565275, %v1711
    %v1713 = vshll.u32 683565275, %v1710
    %v1714 = vshrl.u32 2475754826, %v1711
    %v1715 = vor.u32 %v1713, %v1714
    %v1716 = vshll.u32 2475754826, %v1710
    %v1717 = vshrl.u32 2131351028, %v1711
    %v1718 = vor.u32 %v1716, %v1717
    %v1719 = vshll.u32 2131351028, %v1710
    %v1720 = vshrl.u32 2102212464, %v1711
    %v1721 = vor.u32 %v1719, %v1720
    %v1722 = vshll.u32 2102212464, %v1710
    %v1723 = vshrl.u32 920167782, %v1711
    %v1724 = vor.u32 %v1722, %v1723
    %v1725 = vshll.u32 920167782, %v1710
    %v1726 = vshrl.u32 1326507024, %v1711
    %v1727 = vor.u32 %v1725, %v1726
    %vm1728 = vcmp.lt.s32.totalorder %v1709, 1
    %vm1729 = vcmp.lt.s32.totalorder %v1709, 2
    %vm1730 = vcmp.lt.s32.totalorder %v1709, 3
    %vm1731 = vcmp.lt.s32.totalorder %v1709, 4
    %v1732 = vsel %vm1728, %v1712, %v1715
    %v1733 = vsel %vm1731, %v1721, 2102212464
    %v1734 = vsel %vm1730, %v1718, %v1733
    %v1735 = vsel %vm1729, %v1732, %v1734
    %v1736 = vsel %vm1728, %v1715, %v1718
    %v1737 = vsel %vm1731, %v1724, 920167782
    %v1738 = vsel %vm1730, %v1721, %v1737
    %v1739 = vsel %vm1729, %v1736, %v1738
    %v1740 = vsel %vm1728, %v1718, %v1721
    %v1741 = vsel %vm1731, %v1727, 1326507024
    %v1742 = vsel %vm1730, %v1724, %v1741
    %v1743 = vsel %vm1729, %v1740, %v1742
    %v1744 = vshll.u32 %v1704, 8
    %v1745 = vmul.u32.u64.compose %v1744, %v1743
    %v1746 = vextract.low.u32 %v1745
    %v1747 = vextract.high.u32 %v1745
    %v1748 = vmul.u32.u64.compose %v1744, %v1739
    %v1749 = vextract.low.u32 %v1748
    %v1750 = vextract.high.u32 %v1748
    %v1751 = vmul.u32 %v1744, %v1735
    %v1752 = vadd.s32 %v1747, %v1749
    %vm1753 = vc.u32 %v1747, %v1749
    %v1754 = vadd.s32 %v1750, 1
    %v1755 = vsel %vm1753, %v1754, %v1750
    %v1756 = vadd.s32 %v1751, %v1755
    %v1757 = vadd.s32 %v1756, 536870912
    %v1758 = vshrl.u32 %v1757, 30
    %v1759 = vshll.u32 %v1758, 30
    %v1760 = vsub.s32 %v1756, %v1759
    %vm1761 = vcmp.lt.s32.totalorder %v1760, 0
    %v1762 = vsub.s32 0, %v1760
    %v1763 = vsel %vm1761, %v1762, %v1760
    %v1764 = vclz %v1763
    %v1765 = vsub.s32 %v1764, 2
    %vm1766 = vcmp.gt.s32.totalorder 0, %v1765
    %v1767 = vsel %vm1766, 0, %v1765
    %v1768 = vsub.s32 32, %v1767
    %v1769 = vshll.u32 %v1760, %v1767
    %v1770 = vshrl.u32 %v1752, %v1768
    %v1771 = vor.u32 %v1769, %v1770
    %v1772 = vsub.s32 4294967266, %v1767
    %v1773 = vadd.s32 %v1772, 127
    %v1774 = vshll.u32 %v1773, 23
    %v1775 = vor.u32 4788187, %v1774
    %v1776 = vand.u32 2147483647, %v1775
    %v1778 = vcvt.s32.f32 %v1771
    %v1779 = vmul.f32 %v1778, %v1776
    %v1780 = vxor.u32 %v1779, 2147483648
    %v1781 = vsel %vm1698, %v1780, %v1779
    %v1782 = vsub.s32 4, %v1758
    %v1783 = vsel %vm1698, %v1782, %v1758
    %v1784 = vsel %vm1697, %v1271, %v1781
    %v1785 = vsel %vm1697, 0, %v1783
    %v1786 = vcosq.f32.pop %v1784
    %v1787 = vsinq.f32.pop %v1784
    %vm1788 = vweird.f32 %v1271
    %v1789 = vand.u32 %v1785, 3
    %vm1790 = vcmp.lt.s32.totalorder %v1789, 2
    %vm1791 = vcmp.eq.s32.totalorder %v1789, 0
    %v1792 = vxor.u32 %v1787, 2147483648
    %v1793 = vsel %vm1791, %v1786, %v1792
    %vm1794 = vcmp.eq.s32.totalorder %v1789, 2
    %v1795 = vxor.u32 %v1786, 2147483648
    %v1796 = vsel %vm1794, %v1795, %v1787
    %v1797 = vsel %vm1790, %v1793, %v1796
    %v1798 = vsel %vm1788, nan, %v1797
    %v1799 = vand.u32 2147483647, %v1276
    %vm1800 = vcmp.le.f32.partialorder %v1799, 0.7853982
    %vm1801 = vcmp.lt.s32.totalorder %v1276, 0
    %v1802 = vand.u32 %v1276, 2139095040
    %v1803 = vshrl.u32 %v1802, 23
    %v1804 = vsub.s32 %v1803, 127
    %v1805 = vand.u32 2147483647, %v1276
    %v1806 = vand.u32 %v1805, 8388607
    %v1807 = vor.u32 %v1806, 8388608
    %v1808 = vsub.s32 0, %v1807
    %v1809 = vadd.s32 %v1804, 1
    %vm1810 = vcmp.gt.s32.totalorder %v1809, 0
    %v1811 = vsel %vm1810, %v1809, 0
    %v1812 = vshrl.u32 %v1811, 5
    %v1813 = vand.u32 %v1811, 31
    %v1814 = vsub.s32 32, %v1813
    %v1815 = vshrl.u32 683565275, %v1814
    %v1816 = vshll.u32 683565275, %v1813
    %v1817 = vshrl.u32 2475754826, %v1814
    %v1818 = vor.u32 %v1816, %v1817
    %v1819 = vshll.u32 2475754826, %v1813
    %v1820 = vshrl.u32 2131351028, %v1814
    %v1821 = vor.u32 %v1819, %v1820
    %v1822 = vshll.u32 2131351028, %v1813
    %v1823 = vshrl.u32 2102212464, %v1814
    %v1824 = vor.u32 %v1822, %v1823
    %v1825 = vshll.u32 2102212464, %v1813
    %v1826 = vshrl.u32 920167782, %v1814
    %v1827 = vor.u32 %v1825, %v1826
    %v1828 = vshll.u32 920167782, %v1813
    %v1829 = vshrl.u32 1326507024, %v1814
    %v1830 = vor.u32 %v1828, %v1829
    %vm1831 = vcmp.lt.s32.totalorder %v1812, 1
    %vm1832 = vcmp.lt.s32.totalorder %v1812, 2
    %vm1833 = vcmp.lt.s32.totalorder %v1812, 3
    %vm1834 = vcmp.lt.s32.totalorder %v1812, 4
    %v1835 = vsel %vm1831, %v1815, %v1818
    %v1836 = vsel %vm1834, %v1824, 2102212464
    %v1837 = vsel %vm1833, %v1821, %v1836
    %v1838 = vsel %vm1832, %v1835, %v1837
    %v1839 = vsel %vm1831, %v1818, %v1821
    %v1840 = vsel %vm1834, %v1827, 920167782
    %v1841 = vsel %vm1833, %v1824, %v1840
    %v1842 = vsel %vm1832, %v1839, %v1841
    %v1843 = vsel %vm1831, %v1821, %v1824
    %v1844 = vsel %vm1834, %v1830, 1326507024
    %v1845 = vsel %vm1833, %v1827, %v1844
    %v1846 = vsel %vm1832, %v1843, %v1845
    %v1847 = vshll.u32 %v1807, 8
    %v1848 = vmul.u32.u64.compose %v1847, %v1846
    %v1849 = vextract.low.u32 %v1848
    %v1850 = vextract.high.u32 %v1848
    %v1851 = vmul.u32.u64.compose %v1847, %v1842
    %v1852 = vextract.low.u32 %v1851
    %v1853 = vextract.high.u32 %v1851
    %v1854 = vmul.u32 %v1847, %v1838
    %v1855 = vadd.s32 %v1850, %v1852
    %vm1856 = vc.u32 %v1850, %v1852
    %v1857 = vadd.s32 %v1853, 1
    %v1858 = vsel %vm1856, %v1857, %v1853
    %v1859 = vadd.s32 %v1854, %v1858
    %v1860 = vadd.s32 %v1859, 536870912
    %v1861 = vshrl.u32 %v1860, 30
    %v1862 = vshll.u32 %v1861, 30
    %v1863 = vsub.s32 %v1859, %v1862
    %vm1864 = vcmp.lt.s32.totalorder %v1863, 0
    %v1865 = vsub.s32 0, %v1863
    %v1866 = vsel %vm1864, %v1865, %v1863
    %v1867 = vclz %v1866
    %v1868 = vsub.s32 %v1867, 2
    %vm1869 = vcmp.gt.s32.totalorder 0, %v1868
    %v1870 = vsel %vm1869, 0, %v1868
    %v1871 = vsub.s32 32, %v1870
    %v1872 = vshll.u32 %v1863, %v1870
    %v1873 = vshrl.u32 %v1855, %v1871
    %v1874 = vor.u32 %v1872, %v1873
    %v1875 = vsub.s32 4294967266, %v1870
    %v1876 = vadd.s32 %v1875, 127
    %v1877 = vshll.u32 %v1876, 23
    %v1878 = vor.u32 4788187, %v1877
    %v1879 = vand.u32 2147483647, %v1878
    %v1881 = vcvt.s32.f32 %v1874
    %v1882 = vmul.f32 %v1881, %v1879
    %v1883 = vxor.u32 %v1882, 2147483648
    %v1884 = vsel %vm1801, %v1883, %v1882
    %v1885 = vsub.s32 4, %v1861
    %v1886 = vsel %vm1801, %v1885, %v1861
    %v1887 = vsel %vm1800, %v1276, %v1884
    %v1888 = vsel %vm1800, 0, %v1886
    %v1889 = vcosq.f32.pop %v1887
    %v1890 = vsinq.f32.pop %v1887
    %vm1891 = vweird.f32 %v1276
    %v1892 = vand.u32 %v1888, 3
    %vm1893 = vcmp.lt.s32.totalorder %v1892, 2
    %vm1894 = vcmp.eq.s32.totalorder %v1892, 0
    %v1895 = vxor.u32 %v1890, 2147483648
    %v1896 = vsel %vm1894, %v1889, %v1895
    %vm1897 = vcmp.eq.s32.totalorder %v1892, 2
    %v1898 = vxor.u32 %v1889, 2147483648
    %v1899 = vsel %vm1897, %v1898, %v1890
    %v1900 = vsel %vm1893, %v1896, %v1899
    %v1901 = vsel %vm1891, nan, %v1900
    %v1902 = vand.u32 2147483647, %v1281
    %vm1903 = vcmp.le.f32.partialorder %v1902, 0.7853982
    %vm1904 = vcmp.lt.s32.totalorder %v1281, 0
    %v1905 = vand.u32 %v1281, 2139095040
    %v1906 = vshrl.u32 %v1905, 23
    %v1907 = vsub.s32 %v1906, 127
    %v1908 = vand.u32 2147483647, %v1281
    %v1909 = vand.u32 %v1908, 8388607
    %v1910 = vor.u32 %v1909, 8388608
    %v1911 = vsub.s32 0, %v1910
    %v1912 = vadd.s32 %v1907, 1
    %vm1913 = vcmp.gt.s32.totalorder %v1912, 0
    %v1914 = vsel %vm1913, %v1912, 0
    %v1915 = vshrl.u32 %v1914, 5
    %v1916 = vand.u32 %v1914, 31
    %v1917 = vsub.s32 32, %v1916
    %v1918 = vshrl.u32 683565275, %v1917
    %v1919 = vshll.u32 683565275, %v1916
    %v1920 = vshrl.u32 2475754826, %v1917
    %v1921 = vor.u32 %v1919, %v1920
    %v1922 = vshll.u32 2475754826, %v1916
    %v1923 = vshrl.u32 2131351028, %v1917
    %v1924 = vor.u32 %v1922, %v1923
    %v1925 = vshll.u32 2131351028, %v1916
    %v1926 = vshrl.u32 2102212464, %v1917
    %v1927 = vor.u32 %v1925, %v1926
    %v1928 = vshll.u32 2102212464, %v1916
    %v1929 = vshrl.u32 920167782, %v1917
    %v1930 = vor.u32 %v1928, %v1929
    %v1931 = vshll.u32 920167782, %v1916
    %v1932 = vshrl.u32 1326507024, %v1917
    %v1933 = vor.u32 %v1931, %v1932
    %vm1934 = vcmp.lt.s32.totalorder %v1915, 1
    %vm1935 = vcmp.lt.s32.totalorder %v1915, 2
    %vm1936 = vcmp.lt.s32.totalorder %v1915, 3
    %vm1937 = vcmp.lt.s32.totalorder %v1915, 4
    %v1938 = vsel %vm1934, %v1918, %v1921
    %v1939 = vsel %vm1937, %v1927, 2102212464
    %v1940 = vsel %vm1936, %v1924, %v1939
    %v1941 = vsel %vm1935, %v1938, %v1940
    %v1942 = vsel %vm1934, %v1921, %v1924
    %v1943 = vsel %vm1937, %v1930, 920167782
    %v1944 = vsel %vm1936, %v1927, %v1943
    %v1945 = vsel %vm1935, %v1942, %v1944
    %v1946 = vsel %vm1934, %v1924, %v1927
    %v1947 = vsel %vm1937, %v1933, 1326507024
    %v1948 = vsel %vm1936, %v1930, %v1947
    %v1949 = vsel %vm1935, %v1946, %v1948
    %v1950 = vshll.u32 %v1910, 8
    %v1951 = vmul.u32.u64.compose %v1950, %v1949
    %v1952 = vextract.low.u32 %v1951
    %v1953 = vextract.high.u32 %v1951
    %v1954 = vmul.u32.u64.compose %v1950, %v1945
    %v1955 = vextract.low.u32 %v1954
    %v1956 = vextract.high.u32 %v1954
    %v1957 = vmul.u32 %v1950, %v1941
    %v1958 = vadd.s32 %v1953, %v1955
    %vm1959 = vc.u32 %v1953, %v1955
    %v1960 = vadd.s32 %v1956, 1
    %v1961 = vsel %vm1959, %v1960, %v1956
    %v1962 = vadd.s32 %v1957, %v1961
    %v1963 = vadd.s32 %v1962, 536870912
    %v1964 = vshrl.u32 %v1963, 30
    %v1965 = vshll.u32 %v1964, 30
    %v1966 = vsub.s32 %v1962, %v1965
    %vm1967 = vcmp.lt.s32.totalorder %v1966, 0
    %v1968 = vsub.s32 0, %v1966
    %v1969 = vsel %vm1967, %v1968, %v1966
    %v1970 = vclz %v1969
    %v1971 = vsub.s32 %v1970, 2
    %vm1972 = vcmp.gt.s32.totalorder 0, %v1971
    %v1973 = vsel %vm1972, 0, %v1971
    %v1974 = vsub.s32 32, %v1973
    %v1975 = vshll.u32 %v1966, %v1973
    %v1976 = vshrl.u32 %v1958, %v1974
    %v1977 = vor.u32 %v1975, %v1976
    %v1978 = vsub.s32 4294967266, %v1973
    %v1979 = vadd.s32 %v1978, 127
    %v1980 = vshll.u32 %v1979, 23
    %v1981 = vor.u32 4788187, %v1980
    %v1982 = vand.u32 2147483647, %v1981
    %v1984 = vcvt.s32.f32 %v1977
    %v1985 = vmul.f32 %v1984, %v1982
    %v1986 = vxor.u32 %v1985, 2147483648
    %v1987 = vsel %vm1904, %v1986, %v1985
    %v1988 = vsub.s32 4, %v1964
    %v1989 = vsel %vm1904, %v1988, %v1964
    %v1990 = vsel %vm1903, %v1281, %v1987
    %v1991 = vsel %vm1903, 0, %v1989
    %v1992 = vcosq.f32.pop %v1990
    %v1993 = vsinq.f32.pop %v1990
    %vm1994 = vweird.f32 %v1281
    %v1995 = vand.u32 %v1991, 3
    %vm1996 = vcmp.lt.s32.totalorder %v1995, 2
    %vm1997 = vcmp.eq.s32.totalorder %v1995, 0
    %v1998 = vxor.u32 %v1993, 2147483648
    %v1999 = vsel %vm1997, %v1992, %v1998
    %vm2000 = vcmp.eq.s32.totalorder %v1995, 2
    %v2001 = vxor.u32 %v1992, 2147483648
    %v2002 = vsel %vm2000, %v2001, %v1993
    %v2003 = vsel %vm1996, %v1999, %v2002
    %v2004 = vsel %vm1994, nan, %v2003
    %v2005 = vld [vmem:[%s5] sm:$0xff]
    %v2006 = vld [vmem:[%s5 + $0x8] sm:$0xff]
    %v2007 = vld [vmem:[%s5 + $0x10] sm:$0xff]
    %v2008 = vld [vmem:[%s5 + $0x18] sm:$0xff]
    %v2009 = vld [vmem:[%s5 + $0x20] sm:$0xff]
    %v2010 = vld [vmem:[%s5 + $0x28] sm:$0xff]
    %v2011 = vld [vmem:[%s5 + $0x30] sm:$0x3]
    %2013 = vset.pattern.permute.xlu0 0
    %2014 = vperm.xlu0 %2013, %v2005
    %v2015 = vpop.permute.xlu0 %2014
    %2018 = vset.pattern.permute.xlu0 0
    %2019 = vperm.xlu0 %2018, %v2006
    %v2020 = vpop.permute.xlu0 %2019
    %2023 = vset.pattern.permute.xlu0 0
    %2024 = vperm.xlu0 %2023, %v2007
    %v2025 = vpop.permute.xlu0 %2024
    %2028 = vset.pattern.permute.xlu0 0
    %2029 = vperm.xlu0 %2028, %v2008
    %v2030 = vpop.permute.xlu0 %2029
    %2033 = vset.pattern.permute.xlu0 0
    %2034 = vperm.xlu0 %2033, %v2009
    %v2035 = vpop.permute.xlu0 %2034
    %2038 = vset.pattern.permute.xlu0 0
    %2039 = vperm.xlu0 %2038, %v2010
    %v2040 = vpop.permute.xlu0 %2039
    %2043 = vset.pattern.permute.xlu0 0
    %2044 = vperm.xlu0 %2043, %v2011
    %v2045 = vpop.permute.xlu0 %2044
    %v2047 = vmul.f32 %v2015, %v1386
    %v2048 = vmul.f32 %v2020, %v1489
    %v2049 = vmul.f32 %v2025, %v1592
    %v2050 = vmul.f32 %v2030, %v1695
    %v2051 = vmul.f32 %v2035, %v1798
    %v2052 = vmul.f32 %v2040, %v1901
    %v2053 = vmul.f32 %v2045, %v2004
    %v2054 = vadd.f32 %v2047, %v2048
    %v2055 = vadd.f32 %v2054, %v2049
    %v2056 = vadd.f32 %v2055, %v2050
    %v2057 = vadd.f32 %v2056, %v2051
    %v2058 = vadd.f32 %v2057, %v2052
    %v2059 = vsel %vm1180, %v2053, 0.0
    %v2060 = vadd.f32 %v2058, %v2059
    %v2061 = vrot.slane %v2060, 4
    %v2062 = vadd.f32 %v2060, %v2061
    %v2063 = vrot.slane %v2062, 2
    %v2064 = vadd.f32 %v2062, %v2063
    %v2065 = vrot.slane %v2064, 1
    %v2066 = vadd.f32 %v2064, %v2065
    %s2067 = sld [smem:[#allocation2]]
    %v2068 = vstv %s2067
    %v2069 = vadd.f32 %v2066, %v2068
    %2070 = vst [vmem:[#allocation3] sm:$0x1] %v2069
    // Predicated region
    $region30: #{tpu_custom_call.1} parent=1 // pred_check
      _
    $region31: #{tpu_custom_call.1} parent=1 // pred_check_branch
      %2072 = sbr.rel (0) target = $region33
    $region32: #{tpu_custom_call.1} parent=1 // pred_region
      %s2074 = ssub.s32 16, 16
      %2075 = vsyncadd [#allocation4], %s2074
      %s2077 = sshll.u32 [#allocation3], 4
      %s2078 = int_to_ptr.vmem [resolvable:$true] %s2077
      %2080 = dma.vmem_to_hbm [thread:$0]  %s2078, 16, %s7, [#allocation4]
    $region33: #{tpu_custom_call.1} parent=1 // pred_fallthru
      _
    // Predicated region
    $region34: #{tpu_custom_call.1} parent=1 // pred_check
      _
    $region35: #{tpu_custom_call.1} parent=1 // pred_check_branch
      %2082 = sbr.rel (0) target = $region37
    $region36: #{tpu_custom_call.1} parent=1 // pred_region
      %2083 = dma.done [#allocation4], 16
    $region37: #{tpu_custom_call.1} parent=1 // pred_fallthru
      _
    %2084 = vsyncpa [#allocation4], 1

</llo_original>
